<compile_context>
chip_gen: v7x
topology: tpu7x:2x2x1
jax: 0.10.0
libtpu: 0.0.40
codegen_flags: <defaults>
</compile_context>

<pallas_src>
import functools

import jax
import jax.numpy as jnp
from jax import lax
from jax.experimental import pallas as pl
from jax.experimental.pallas import tpu as pltpu


def _round_up(x: int, m: int) -> int:
    return ((x + m - 1) // m) * m


def _vmem_capacity_bytes() -> int:
    """Physical VMEM per TensorCore; conservative 64 MiB (v7x) if unknown."""
    try:
        return int(pltpu.get_tpu_info().vmem_capacity_bytes)
    except Exception:
        pass
    try:
        kind = jax.devices()[0].device_kind.lower()
        if ("v5 lite" in kind or "v5e" in kind or "v6" in kind):
            return 128 * 2**20
    except Exception:
        pass
    return 64 * 2**20


def _lse_kernel(src_ref, tgt_ref, lse_ref, m_sc, l_sc, *, t_tile, n_valid_last):
    """One (A_tile, T_tile) grid step of the streaming log-sum-exp.

    src_ref: (A_tile, D)  bf16 -- gathered source rows for this A tile
    tgt_ref: (T_tile, D)  bf16 -- current slab of target rows
    lse_ref: (A_tile, 1)  f32  -- per-example logsumexp (written on last tile)
    m_sc/l_sc: (A_tile, 1) f32 scratch -- running max / running sum-exp
    n_valid_last: number of valid target columns in the LAST T tile, or None
                  if the target dimension needs no padding.
    """
    j = pl.program_id(1)
    nj = pl.num_programs(1)

    @pl.when(j == 0)
    def _():
        m_sc[...] = jnp.full(m_sc.shape, -jnp.inf, dtype=m_sc.dtype)
        l_sc[...] = jnp.zeros(l_sc.shape, dtype=l_sc.dtype)

    # (A_tile, T_tile) logits on the MXU. Transposed-RHS contraction avoids an
    # XLU transpose of the target slab; accumulate in f32.
    logits = lax.dot_general(
        src_ref[...], tgt_ref[...],
        dimension_numbers=(((1,), (1,)), ((), ())),
        preferred_element_type=jnp.float32)

    def online_lse_update(lg):
        m_prev = m_sc[...]
        m_new = jnp.maximum(m_prev, jnp.max(lg, axis=-1, keepdims=True))
        l_sc[...] = (l_sc[...] * jnp.exp(m_prev - m_new)
                     + jnp.sum(jnp.exp(lg - m_new), axis=-1, keepdims=True))
        m_sc[...] = m_new

    if n_valid_last is None:
        # Target dim is an exact multiple of t_tile: no masking anywhere.
        online_lse_update(logits)
    else:
        # Steady-state tiles: no iota / compare / select at all.
        @pl.when(j < nj - 1)
        def _():
            online_lse_update(logits)

        # Last T tile only: mask padded target columns with a (1, t_tile) iota.
        @pl.when(j == nj - 1)
        def _():
            col = lax.broadcasted_iota(jnp.int32, (1, t_tile), 1)
            online_lse_update(jnp.where(col < n_valid_last, logits, -jnp.inf))

    @pl.when(j == nj - 1)
    def _():
        lse_ref[...] = m_sc[...] + jnp.log(l_sc[...])


def _one_side_matching_loss(source_sel: jax.Array,
                            target: jax.Array,
                            labels: jax.Array,
                            *,
                            a_tile=None,
                            t_tile=None,
                            compute_dtype=jnp.bfloat16) -> jax.Array:
    """Streaming Pallas kernel for one matching direction; returns scalar loss."""
    a, d = source_sel.shape
    t, _ = target.shape

    # ---- generation-aware tile / VMEM budget selection -----------------------
    big_vmem = _vmem_capacity_bytes() >= 100 * 2**20   # v5e / v6e: 128 MiB
    vmem_budget = (100 if big_vmem else 44) * 2**20    # v7x: keep <= 44 MiB

    if a_tile is None:
        a_tile = 512 if big_vmem else 256
    if t_tile is None:
        t_tile = 4096 if big_vmem else 2048

    # Dtype-aligned tiles: bf16 sublane packing wants a_tile % 16 == 0; the f32
    # logits tile wants a lane-dense t_tile % 128 == 0.
    a_tile = min(_round_up(max(a_tile, 16), 16), _round_up(a, 16))
    t_tile = min(_round_up(max(t_tile, 128), 128), _round_up(t, 128))
    if a >= 32:
        # Ensure >= 2 A tiles so the "parallel" A axis feeds both v7x cores.
        a_tile = min(a_tile, _round_up((a + 1) // 2, 16))

    itemsize = jnp.dtype(compute_dtype).itemsize

    def est_vmem(tt):
        # Double-buffered src/tgt slabs + f32 logits/exp temporaries + scratch.
        return ((2 * a_tile + 2 * tt) * d * itemsize
                + 4 * a_tile * tt * 4
                + 6 * a_tile * 4)

    while t_tile > 128 and est_vmem(t_tile) > vmem_budget:
        t_tile = max(128, ((t_tile // 2) // 128) * 128)

    a_pad = _round_up(a, a_tile)
    t_pad = _round_up(t, t_tile)
    # Last T tile always has >= 1 valid column -> the online LSE never sees an
    # all -inf tile (would give inf - inf = NaN in the rescale).
    assert t_pad - t < t_tile
    n_valid_last = (t - (t_pad // t_tile - 1) * t_tile) if t_pad != t else None

    # ---- inputs --------------------------------------------------------------
    # bf16 feeds to the MXU (halves HBM traffic / VMEM footprint); f32 accum.
    src = source_sel.astype(compute_dtype)
    tgt = target.astype(compute_dtype)
    lbl = labels.astype(jnp.int32)

    # Positive logit, computed ONCE through the same bf16-multiply /
    # f32-accumulate path as the MXU logits (labels assumed to lie in [0, t)).
    pos = jnp.einsum('ad,ad->a', src, jnp.take(tgt, lbl, axis=0),
                     preferred_element_type=jnp.float32)

    src_p = jnp.pad(src, ((0, a_pad - a), (0, 0))) if a_pad != a else src
    tgt_p = jnp.pad(tgt, ((0, t_pad - t), (0, 0))) if t_pad != t else tgt

    kernel = functools.partial(_lse_kernel, t_tile=t_tile,
                               n_valid_last=n_valid_last)

    grid = (a_pad // a_tile, t_pad // t_tile)
    vmem_limit_bytes = int(min(vmem_budget,
                               max(32 * 2**20, 2 * est_vmem(t_tile))))

    cost = pl.CostEstimate(
        flops=2 * a_pad * t_pad * d,
        transcendentals=a_pad * t_pad,
        bytes_accessed=(a_pad * d + grid[0] * t_pad * d) * itemsize + a_pad * 4)

    lse = pl.pallas_call(
        kernel,
        out_shape=jax.ShapeDtypeStruct((a_pad, 1), jnp.float32),
        grid_spec=pltpu.PrefetchScalarGridSpec(
            num_scalar_prefetch=0,
            grid=grid,
            in_specs=[
                pl.BlockSpec((a_tile, d), lambda i, j: (i, 0)),   # src rows
                pl.BlockSpec((t_tile, d), lambda i, j: (j, 0)),   # target slab
            ],
            out_specs=pl.BlockSpec((a_tile, 1), lambda i, j: (i, 0)),
            scratch_shapes=[pltpu.VMEM((a_tile, 1), jnp.float32),
                            pltpu.VMEM((a_tile, 1), jnp.float32)],
        ),
        compiler_params=pltpu.CompilerParams(
            dimension_semantics=("parallel", "arbitrary"),
            vmem_limit_bytes=vmem_limit_bytes),
        cost_estimate=cost,
    )(src_p, tgt_p)

    # per-example CE loss = logsumexp - positive; padded aligned rows (garbage
    # lse, label-less) are excluded by the [:a] slice before the mean.
    per_example = lse[:a, 0] - pos
    return jnp.mean(per_example)


@functools.partial(jax.jit,
                   static_argnames=("loss_direction", "a_tile", "t_tile"))
def matching_loss(left: jax.Array,
                  right: jax.Array,
                  alignment: jax.Array,
                  loss_direction: str = "symmetrical",
                  a_tile=None,
                  t_tile=None) -> jax.Array:
    """MatchingLoss.forward (negatives=None path).

    left:      (num_left,  dim) float -- representations[SIDES[0]]
    right:     (num_right, dim) float -- representations[SIDES[1]]
    alignment: (2, num_aligned) int   -- aligned node id pairs
    """
    partial_losses = []

    if loss_direction in ("left_to_right", "symmetrical"):
        # source = left, target = right; positives are alignment[1]
        src_sel = jnp.take(left, alignment[0], axis=0)
        partial_losses.append(_one_side_matching_loss(
            src_sel, right, alignment[1], a_tile=a_tile, t_tile=t_tile))

    if loss_direction in ("right_to_left", "symmetrical"):
        # alignment.flip(0): source = right, target = left; positives alignment[0]
        src_sel = jnp.take(right, alignment[1], axis=0)
        partial_losses.append(_one_side_matching_loss(
            src_sel, left, alignment[0], a_tile=a_tile, t_tile=t_tile))

    assert len(partial_losses) > 0
    return sum(partial_losses) / len(partial_losses)


def _reference(left, right, alignment, loss_direction="symmetrical",
               compute_dtype=jnp.bfloat16):
    """Pure-JAX reference (same bf16-matmul / f32-softmax precision path)."""
    def one_side(src, tgt, align_src, align_tgt):
        s = jnp.take(src, align_src, axis=0).astype(compute_dtype)
        logits = jnp.dot(s, tgt.astype(compute_dtype).T,
                         preferred_element_type=jnp.float32)
        logp = jax.nn.log_softmax(logits, axis=-1)
        return -jnp.mean(logp[jnp.arange(align_src.shape[0]), align_tgt])

    losses = []
    if loss_direction in ("left_to_right", "symmetrical"):
        losses.append(one_side(left, right, alignment[0], alignment[1]))
    if loss_direction in ("right_to_left", "symmetrical"):
        losses.append(one_side(right, left, alignment[1], alignment[0]))
    return sum(losses) / len(losses)


if __name__ == "__main__":
    key = jax.random.PRNGKey(0)
    k_l, k_r = jax.random.split(key, 2)

    num_left, num_right, dim, num_aligned = 192, 160, 128, 96

    left = jax.random.normal(k_l, (num_left, dim), dtype=jnp.float32)
    right = jax.random.normal(k_r, (num_right, dim), dtype=jnp.float32)
    # Deterministic alignment pairs.
    alignment = jnp.stack([
        (jnp.arange(num_aligned, dtype=jnp.int32) * 5) % num_left,
        (jnp.arange(num_aligned, dtype=jnp.int32) * 3) % num_right,
    ], axis=0)

    # Small explicit tiles: exercises a multi-tile A grid (>= 2 A tiles), a
    # multi-tile T grid with the steady-state (unmasked) branch AND the
    # padded-last-T-tile masking branch, plus the online-LSE reduction.
    loss = matching_loss(left, right, alignment,
                         loss_direction="symmetrical", a_tile=64, t_tile=128)
    jax.block_until_ready(loss)

    ref = _reference(left, right, alignment, loss_direction="symmetrical")
    assert jnp.allclose(loss, ref, atol=3e-3, rtol=3e-3), (loss, ref)

    # Auto (generation-aware) tiling path + single-direction variant.
    loss_l2r = matching_loss(left, right, alignment,
                             loss_direction="left_to_right")
    jax.block_until_ready(loss_l2r)
    ref_l2r = _reference(left, right, alignment, loss_direction="left_to_right")
    assert jnp.allclose(loss_l2r, ref_l2r, atol=3e-3, rtol=3e-3), (loss_l2r, ref_l2r)

    print("KERNEL_OK")
</pallas_src>

<mosaic_0001>
module attributes {stable_mosaic.version = 11 : i64} {
  func.func @_lse_kernel(%arg0: i32, %arg1: i32, %arg2: memref<48x128xbf16, #tpu.memory_space<vmem>>, %arg3: memref<128x128xbf16, #tpu.memory_space<vmem>>, %arg4: memref<48x1xf32, #tpu.memory_space<vmem>>, %arg5: memref<48x1xf32, #tpu.memory_space<vmem>>, %arg6: memref<48x1xf32, #tpu.memory_space<vmem>>) attributes {dimension_semantics = [#tpu.dimension_semantics<parallel>, #tpu.dimension_semantics<arbitrary>], iteration_bounds = array<i64: 2, 2>, scalar_prefetch = 0 : i64, scratch_operands = 2 : i64, tpu.core_type = #tpu.core_type<tc>, window_params = [{transform_indices = @transform_0, window_bounds = array<i64: 48, 128>}, {transform_indices = @transform_1, window_bounds = array<i64: 128, 128>}, {transform_indices = @transform_2, window_bounds = array<i64: 48, 1>}]} {
    %c0_i32 = arith.constant 0 : i32
    %0 = arith.cmpi eq, %arg1, %c0_i32 : i32
    %1 = arith.extui %0 : i1 to i32
    %c0_i32_0 = arith.constant 0 : i32
    %2 = arith.cmpi ne, %1, %c0_i32_0 : i32
    scf.if %2 {
      %cst_9 = arith.constant 0xFF800000 : f32
      %15 = vector.broadcast %cst_9 : f32 to vector<48x1xf32>
      %c0_10 = arith.constant 0 : index
      %c0_11 = arith.constant 0 : index
      %16 = vector.load %arg5[%c0_10, %c0_11] : memref<48x1xf32, #tpu.memory_space<vmem>>, vector<48x1xf32>
      tpu.vector_store %arg5[%c0_10, %c0_11], %15 {strides = array<i32>} : memref<48x1xf32, #tpu.memory_space<vmem>>, vector<48x1xf32>,
      %cst_12 = arith.constant 0.000000e+00 : f32
      %17 = vector.broadcast %cst_12 : f32 to vector<48x1xf32>
      %c0_13 = arith.constant 0 : index
      %c0_14 = arith.constant 0 : index
      %18 = vector.load %arg6[%c0_13, %c0_14] : memref<48x1xf32, #tpu.memory_space<vmem>>, vector<48x1xf32>
      tpu.vector_store %arg6[%c0_13, %c0_14], %17 {strides = array<i32>} : memref<48x1xf32, #tpu.memory_space<vmem>>, vector<48x1xf32>,
    } else {
    }
    %c0 = arith.constant 0 : index
    %c0_1 = arith.constant 0 : index
    %3 = vector.load %arg2[%c0, %c0_1] : memref<48x128xbf16, #tpu.memory_space<vmem>>, vector<48x128xbf16>
    %c0_2 = arith.constant 0 : index
    %c0_3 = arith.constant 0 : index
    %4 = vector.load %arg3[%c0_2, %c0_3] : memref<128x128xbf16, #tpu.memory_space<vmem>>, vector<128x128xbf16>
    %cst = arith.constant dense<0.000000e+00> : vector<48x128xf32>
    %5 = tpu.matmul %3, %4, %cst {dimension_numbers = #tpu.dot_dimension_numbers<[1], [1], [0], [0], [0, 0, 1, 0], [], []>} : vector<48x128xbf16>, vector<128x128xbf16>, vector<48x128xf32> -> vector<48x128xf32>
    %c1_i32 = arith.constant 1 : i32
    %6 = arith.cmpi slt, %arg1, %c1_i32 : i32
    %7 = arith.extui %6 : i1 to i32
    %c0_i32_4 = arith.constant 0 : i32
    %8 = arith.cmpi ne, %7, %c0_i32_4 : i32
    scf.if %8 {
      %c0_9 = arith.constant 0 : index
      %c0_10 = arith.constant 0 : index
      %15 = vector.load %arg5[%c0_9, %c0_10] : memref<48x1xf32, #tpu.memory_space<vmem>>, vector<48x1xf32>
      %cst_11 = arith.constant dense<0xFF800000> : vector<48xf32>
      %16 = vector.multi_reduction <maximumf>, %5, %cst_11 [1] : vector<48x128xf32> to vector<48xf32>
      %17 = vector.shape_cast %16 : vector<48xf32> to vector<48x1xf32>
      %18 = arith.maximumf %15, %17 : vector<48x1xf32>
      %c0_12 = arith.constant 0 : index
      %c0_13 = arith.constant 0 : index
      %19 = vector.load %arg6[%c0_12, %c0_13] : memref<48x1xf32, #tpu.memory_space<vmem>>, vector<48x1xf32>
      %20 = arith.subf %15, %18 : vector<48x1xf32>
      %21 = math.exp %20 : vector<48x1xf32>
      %22 = arith.mulf %19, %21 : vector<48x1xf32>
      %23 = vector.broadcast %18 : vector<48x1xf32> to vector<48x128xf32>
      %24 = arith.subf %5, %23 : vector<48x128xf32>
      %25 = math.exp %24 : vector<48x128xf32>
      %cst_14 = arith.constant dense<0.000000e+00> : vector<48xf32>
      %26 = vector.multi_reduction <add>, %25, %cst_14 [1] : vector<48x128xf32> to vector<48xf32>
      %27 = vector.shape_cast %26 : vector<48xf32> to vector<48x1xf32>
      %28 = arith.addf %22, %27 : vector<48x1xf32>
      %c0_15 = arith.constant 0 : index
      %c0_16 = arith.constant 0 : index
      %29 = vector.load %arg6[%c0_15, %c0_16] : memref<48x1xf32, #tpu.memory_space<vmem>>, vector<48x1xf32>
      tpu.vector_store %arg6[%c0_15, %c0_16], %28 {strides = array<i32>} : memref<48x1xf32, #tpu.memory_space<vmem>>, vector<48x1xf32>,
      %c0_17 = arith.constant 0 : index
      %c0_18 = arith.constant 0 : index
      %30 = vector.load %arg5[%c0_17, %c0_18] : memref<48x1xf32, #tpu.memory_space<vmem>>, vector<48x1xf32>
      tpu.vector_store %arg5[%c0_17, %c0_18], %18 {strides = array<i32>} : memref<48x1xf32, #tpu.memory_space<vmem>>, vector<48x1xf32>,
    } else {
    }
    %c1_i32_5 = arith.constant 1 : i32
    %9 = arith.cmpi eq, %arg1, %c1_i32_5 : i32
    %10 = arith.extui %9 : i1 to i32
    %c0_i32_6 = arith.constant 0 : i32
    %11 = arith.cmpi ne, %10, %c0_i32_6 : i32
    scf.if %11 {
      %15 = tpu.iota {dimensions = array<i32: 1>} : vector<1x128xi32>
      %c64_i32 = arith.constant 64 : i32
      %16 = vector.broadcast %c64_i32 : i32 to vector<1x128xi32>
      %17 = arith.cmpi slt, %15, %16 : vector<1x128xi32>
      %cst_9 = arith.constant 0xFF800000 : f32
      %18 = vector.shape_cast %17 : vector<1x128xi1> to vector<1x128xi1>
      %19 = vector.broadcast %18 : vector<1x128xi1> to vector<48x128xi1>
      %20 = vector.broadcast %cst_9 : f32 to vector<48x128xf32>
      %21 = arith.select %19, %5, %20 : vector<48x128xi1>, vector<48x128xf32>
      %c0_10 = arith.constant 0 : index
      %c0_11 = arith.constant 0 : index
      %22 = vector.load %arg5[%c0_10, %c0_11] : memref<48x1xf32, #tpu.memory_space<vmem>>, vector<48x1xf32>
      %cst_12 = arith.constant dense<0xFF800000> : vector<48xf32>
      %23 = vector.multi_reduction <maximumf>, %21, %cst_12 [1] : vector<48x128xf32> to vector<48xf32>
      %24 = vector.shape_cast %23 : vector<48xf32> to vector<48x1xf32>
      %25 = arith.maximumf %22, %24 : vector<48x1xf32>
      %c0_13 = arith.constant 0 : index
      %c0_14 = arith.constant 0 : index
      %26 = vector.load %arg6[%c0_13, %c0_14] : memref<48x1xf32, #tpu.memory_space<vmem>>, vector<48x1xf32>
      %27 = arith.subf %22, %25 : vector<48x1xf32>
      %28 = math.exp %27 : vector<48x1xf32>
      %29 = arith.mulf %26, %28 : vector<48x1xf32>
      %30 = vector.broadcast %25 : vector<48x1xf32> to vector<48x128xf32>
      %31 = arith.subf %21, %30 : vector<48x128xf32>
      %32 = math.exp %31 : vector<48x128xf32>
      %cst_15 = arith.constant dense<0.000000e+00> : vector<48xf32>
      %33 = vector.multi_reduction <add>, %32, %cst_15 [1] : vector<48x128xf32> to vector<48xf32>
      %34 = vector.shape_cast %33 : vector<48xf32> to vector<48x1xf32>
      %35 = arith.addf %29, %34 : vector<48x1xf32>
      %c0_16 = arith.constant 0 : index
      %c0_17 = arith.constant 0 : index
      %36 = vector.load %arg6[%c0_16, %c0_17] : memref<48x1xf32, #tpu.memory_space<vmem>>, vector<48x1xf32>
      tpu.vector_store %arg6[%c0_16, %c0_17], %35 {strides = array<i32>} : memref<48x1xf32, #tpu.memory_space<vmem>>, vector<48x1xf32>,
      %c0_18 = arith.constant 0 : index
      %c0_19 = arith.constant 0 : index
      %37 = vector.load %arg5[%c0_18, %c0_19] : memref<48x1xf32, #tpu.memory_space<vmem>>, vector<48x1xf32>
      tpu.vector_store %arg5[%c0_18, %c0_19], %25 {strides = array<i32>} : memref<48x1xf32, #tpu.memory_space<vmem>>, vector<48x1xf32>,
    } else {
    }
    %c1_i32_7 = arith.constant 1 : i32
    %12 = arith.cmpi eq, %arg1, %c1_i32_7 : i32
    %13 = arith.extui %12 : i1 to i32
    %c0_i32_8 = arith.constant 0 : i32
    %14 = arith.cmpi ne, %13, %c0_i32_8 : i32
    scf.if %14 {
      %c0_9 = arith.constant 0 : index
      %c0_10 = arith.constant 0 : index
      %15 = vector.load %arg5[%c0_9, %c0_10] : memref<48x1xf32, #tpu.memory_space<vmem>>, vector<48x1xf32>
      %c0_11 = arith.constant 0 : index
      %c0_12 = arith.constant 0 : index
      %16 = vector.load %arg6[%c0_11, %c0_12] : memref<48x1xf32, #tpu.memory_space<vmem>>, vector<48x1xf32>
      %17 = math.log %16 : vector<48x1xf32>
      %18 = arith.addf %15, %17 : vector<48x1xf32>
      %c0_13 = arith.constant 0 : index
      %c0_14 = arith.constant 0 : index
      %19 = vector.load %arg4[%c0_13, %c0_14] : memref<48x1xf32, #tpu.memory_space<vmem>>, vector<48x1xf32>
      tpu.vector_store %arg4[%c0_13, %c0_14], %18 {strides = array<i32>} : memref<48x1xf32, #tpu.memory_space<vmem>>, vector<48x1xf32>,
    } else {
    }
    return
  }
  func.func @transform_0(%arg0: i32, %arg1: i32) -> (i32, i32) {
    %c0_i32 = arith.constant 0 : i32
    %c0_i32_0 = arith.constant 0 : i32
    return %arg0, %c0_i32 : i32, i32
  }
  func.func @transform_1(%arg0: i32, %arg1: i32) -> (i32, i32) {
    %c0_i32 = arith.constant 0 : i32
    %c0_i32_0 = arith.constant 0 : i32
    return %arg1, %c0_i32 : i32, i32
  }
  func.func @transform_2(%arg0: i32, %arg1: i32) -> (i32, i32) {
    %c0_i32 = arith.constant 0 : i32
    %c0_i32_0 = arith.constant 0 : i32
    return %arg0, %c0_i32 : i32, i32
  }
}

module attributes {stable_mosaic.version = 11 : i64} {
  func.func @_lse_kernel(%arg0: i32, %arg1: i32, %arg2: memref<48x128xbf16, #tpu.memory_space<vmem>>, %arg3: memref<128x128xbf16, #tpu.memory_space<vmem>>, %arg4: memref<48x1xf32, #tpu.memory_space<vmem>>, %arg5: memref<48x1xf32, #tpu.memory_space<vmem>>, %arg6: memref<48x1xf32, #tpu.memory_space<vmem>>) attributes {dimension_semantics = [#tpu.dimension_semantics<parallel>, #tpu.dimension_semantics<arbitrary>], iteration_bounds = array<i64: 2, 2>, scalar_prefetch = 0 : i64, scratch_operands = 2 : i64, tpu.core_type = #tpu.core_type<tc>, window_params = [{transform_indices = @transform_0, window_bounds = array<i64: 48, 128>}, {transform_indices = @transform_1, window_bounds = array<i64: 128, 128>}, {transform_indices = @transform_2, window_bounds = array<i64: 48, 1>}]} {
    %c0_i32 = arith.constant 0 : i32
    %0 = arith.cmpi eq, %arg1, %c0_i32 : i32
    %1 = arith.extui %0 : i1 to i32
    %c0_i32_0 = arith.constant 0 : i32
    %2 = arith.cmpi ne, %1, %c0_i32_0 : i32
    scf.if %2 {
      %cst_9 = arith.constant 0xFF800000 : f32
      %15 = vector.broadcast %cst_9 : f32 to vector<48x1xf32>
      %c0_10 = arith.constant 0 : index
      %c0_11 = arith.constant 0 : index
      %16 = vector.load %arg5[%c0_10, %c0_11] : memref<48x1xf32, #tpu.memory_space<vmem>>, vector<48x1xf32>
      tpu.vector_store %arg5[%c0_10, %c0_11], %15 {strides = array<i32>} : memref<48x1xf32, #tpu.memory_space<vmem>>, vector<48x1xf32>,
      %cst_12 = arith.constant 0.000000e+00 : f32
      %17 = vector.broadcast %cst_12 : f32 to vector<48x1xf32>
      %c0_13 = arith.constant 0 : index
      %c0_14 = arith.constant 0 : index
      %18 = vector.load %arg6[%c0_13, %c0_14] : memref<48x1xf32, #tpu.memory_space<vmem>>, vector<48x1xf32>
      tpu.vector_store %arg6[%c0_13, %c0_14], %17 {strides = array<i32>} : memref<48x1xf32, #tpu.memory_space<vmem>>, vector<48x1xf32>,
    } else {
    }
    %c0 = arith.constant 0 : index
    %c0_1 = arith.constant 0 : index
    %3 = vector.load %arg2[%c0, %c0_1] : memref<48x128xbf16, #tpu.memory_space<vmem>>, vector<48x128xbf16>
    %c0_2 = arith.constant 0 : index
    %c0_3 = arith.constant 0 : index
    %4 = vector.load %arg3[%c0_2, %c0_3] : memref<128x128xbf16, #tpu.memory_space<vmem>>, vector<128x128xbf16>
    %cst = arith.constant dense<0.000000e+00> : vector<48x128xf32>
    %5 = tpu.matmul %3, %4, %cst {dimension_numbers = #tpu.dot_dimension_numbers<[1], [1], [0], [0], [0, 0, 1, 0], [], []>} : vector<48x128xbf16>, vector<128x128xbf16>, vector<48x128xf32> -> vector<48x128xf32>
    %c1_i32 = arith.constant 1 : i32
    %6 = arith.cmpi slt, %arg1, %c1_i32 : i32
    %7 = arith.extui %6 : i1 to i32
    %c0_i32_4 = arith.constant 0 : i32
    %8 = arith.cmpi ne, %7, %c0_i32_4 : i32
    scf.if %8 {
      %c0_9 = arith.constant 0 : index
      %c0_10 = arith.constant 0 : index
      %15 = vector.load %arg5[%c0_9, %c0_10] : memref<48x1xf32, #tpu.memory_space<vmem>>, vector<48x1xf32>
      %cst_11 = arith.constant dense<0xFF800000> : vector<48xf32>
      %16 = vector.multi_reduction <maximumf>, %5, %cst_11 [1] : vector<48x128xf32> to vector<48xf32>
      %17 = vector.shape_cast %16 : vector<48xf32> to vector<48x1xf32>
      %18 = arith.maximumf %15, %17 : vector<48x1xf32>
      %c0_12 = arith.constant 0 : index
      %c0_13 = arith.constant 0 : index
      %19 = vector.load %arg6[%c0_12, %c0_13] : memref<48x1xf32, #tpu.memory_space<vmem>>, vector<48x1xf32>
      %20 = arith.subf %15, %18 : vector<48x1xf32>
      %21 = math.exp %20 : vector<48x1xf32>
      %22 = arith.mulf %19, %21 : vector<48x1xf32>
      %23 = vector.broadcast %18 : vector<48x1xf32> to vector<48x128xf32>
      %24 = arith.subf %5, %23 : vector<48x128xf32>
      %25 = math.exp %24 : vector<48x128xf32>
      %cst_14 = arith.constant dense<0.000000e+00> : vector<48xf32>
      %26 = vector.multi_reduction <add>, %25, %cst_14 [1] : vector<48x128xf32> to vector<48xf32>
      %27 = vector.shape_cast %26 : vector<48xf32> to vector<48x1xf32>
      %28 = arith.addf %22, %27 : vector<48x1xf32>
      %c0_15 = arith.constant 0 : index
      %c0_16 = arith.constant 0 : index
      %29 = vector.load %arg6[%c0_15, %c0_16] : memref<48x1xf32, #tpu.memory_space<vmem>>, vector<48x1xf32>
      tpu.vector_store %arg6[%c0_15, %c0_16], %28 {strides = array<i32>} : memref<48x1xf32, #tpu.memory_space<vmem>>, vector<48x1xf32>,
      %c0_17 = arith.constant 0 : index
      %c0_18 = arith.constant 0 : index
      %30 = vector.load %arg5[%c0_17, %c0_18] : memref<48x1xf32, #tpu.memory_space<vmem>>, vector<48x1xf32>
      tpu.vector_store %arg5[%c0_17, %c0_18], %18 {strides = array<i32>} : memref<48x1xf32, #tpu.memory_space<vmem>>, vector<48x1xf32>,
    } else {
    }
    %c1_i32_5 = arith.constant 1 : i32
    %9 = arith.cmpi eq, %arg1, %c1_i32_5 : i32
    %10 = arith.extui %9 : i1 to i32
    %c0_i32_6 = arith.constant 0 : i32
    %11 = arith.cmpi ne, %10, %c0_i32_6 : i32
    scf.if %11 {
      %15 = tpu.iota {dimensions = array<i32: 1>} : vector<1x128xi32>
      %c32_i32 = arith.constant 32 : i32
      %16 = vector.broadcast %c32_i32 : i32 to vector<1x128xi32>
      %17 = arith.cmpi slt, %15, %16 : vector<1x128xi32>
      %cst_9 = arith.constant 0xFF800000 : f32
      %18 = vector.shape_cast %17 : vector<1x128xi1> to vector<1x128xi1>
      %19 = vector.broadcast %18 : vector<1x128xi1> to vector<48x128xi1>
      %20 = vector.broadcast %cst_9 : f32 to vector<48x128xf32>
      %21 = arith.select %19, %5, %20 : vector<48x128xi1>, vector<48x128xf32>
      %c0_10 = arith.constant 0 : index
      %c0_11 = arith.constant 0 : index
      %22 = vector.load %arg5[%c0_10, %c0_11] : memref<48x1xf32, #tpu.memory_space<vmem>>, vector<48x1xf32>
      %cst_12 = arith.constant dense<0xFF800000> : vector<48xf32>
      %23 = vector.multi_reduction <maximumf>, %21, %cst_12 [1] : vector<48x128xf32> to vector<48xf32>
      %24 = vector.shape_cast %23 : vector<48xf32> to vector<48x1xf32>
      %25 = arith.maximumf %22, %24 : vector<48x1xf32>
      %c0_13 = arith.constant 0 : index
      %c0_14 = arith.constant 0 : index
      %26 = vector.load %arg6[%c0_13, %c0_14] : memref<48x1xf32, #tpu.memory_space<vmem>>, vector<48x1xf32>
      %27 = arith.subf %22, %25 : vector<48x1xf32>
      %28 = math.exp %27 : vector<48x1xf32>
      %29 = arith.mulf %26, %28 : vector<48x1xf32>
      %30 = vector.broadcast %25 : vector<48x1xf32> to vector<48x128xf32>
      %31 = arith.subf %21, %30 : vector<48x128xf32>
      %32 = math.exp %31 : vector<48x128xf32>
      %cst_15 = arith.constant dense<0.000000e+00> : vector<48xf32>
      %33 = vector.multi_reduction <add>, %32, %cst_15 [1] : vector<48x128xf32> to vector<48xf32>
      %34 = vector.shape_cast %33 : vector<48xf32> to vector<48x1xf32>
      %35 = arith.addf %29, %34 : vector<48x1xf32>
      %c0_16 = arith.constant 0 : index
      %c0_17 = arith.constant 0 : index
      %36 = vector.load %arg6[%c0_16, %c0_17] : memref<48x1xf32, #tpu.memory_space<vmem>>, vector<48x1xf32>
      tpu.vector_store %arg6[%c0_16, %c0_17], %35 {strides = array<i32>} : memref<48x1xf32, #tpu.memory_space<vmem>>, vector<48x1xf32>,
      %c0_18 = arith.constant 0 : index
      %c0_19 = arith.constant 0 : index
      %37 = vector.load %arg5[%c0_18, %c0_19] : memref<48x1xf32, #tpu.memory_space<vmem>>, vector<48x1xf32>
      tpu.vector_store %arg5[%c0_18, %c0_19], %25 {strides = array<i32>} : memref<48x1xf32, #tpu.memory_space<vmem>>, vector<48x1xf32>,
    } else {
    }
    %c1_i32_7 = arith.constant 1 : i32
    %12 = arith.cmpi eq, %arg1, %c1_i32_7 : i32
    %13 = arith.extui %12 : i1 to i32
    %c0_i32_8 = arith.constant 0 : i32
    %14 = arith.cmpi ne, %13, %c0_i32_8 : i32
    scf.if %14 {
      %c0_9 = arith.constant 0 : index
      %c0_10 = arith.constant 0 : index
      %15 = vector.load %arg5[%c0_9, %c0_10] : memref<48x1xf32, #tpu.memory_space<vmem>>, vector<48x1xf32>
      %c0_11 = arith.constant 0 : index
      %c0_12 = arith.constant 0 : index
      %16 = vector.load %arg6[%c0_11, %c0_12] : memref<48x1xf32, #tpu.memory_space<vmem>>, vector<48x1xf32>
      %17 = math.log %16 : vector<48x1xf32>
      %18 = arith.addf %15, %17 : vector<48x1xf32>
      %c0_13 = arith.constant 0 : index
      %c0_14 = arith.constant 0 : index
      %19 = vector.load %arg4[%c0_13, %c0_14] : memref<48x1xf32, #tpu.memory_space<vmem>>, vector<48x1xf32>
      tpu.vector_store %arg4[%c0_13, %c0_14], %18 {strides = array<i32>} : memref<48x1xf32, #tpu.memory_space<vmem>>, vector<48x1xf32>,
    } else {
    }
    return
  }
  func.func @transform_0(%arg0: i32, %arg1: i32) -> (i32, i32) {
    %c0_i32 = arith.constant 0 : i32
    %c0_i32_0 = arith.constant 0 : i32
    return %arg0, %c0_i32 : i32, i32
  }
  func.func @transform_1(%arg0: i32, %arg1: i32) -> (i32, i32) {
    %c0_i32 = arith.constant 0 : i32
    %c0_i32_0 = arith.constant 0 : i32
    return %arg1, %c0_i32 : i32, i32
  }
  func.func @transform_2(%arg0: i32, %arg1: i32) -> (i32, i32) {
    %c0_i32 = arith.constant 0 : i32
    %c0_i32_0 = arith.constant 0 : i32
    return %arg0, %c0_i32 : i32, i32
  }
}

</mosaic_0001>

<llo_original>
// kernel: matching_loss.3
$region0: #{matching_loss.3}
  #allocation0 [shape = 'u32[]', space=smem, size = 0x4, offset = 0x4, fixed_abs, tag = 'smem constant byte address 0x4 - core index']
  #allocation1 [shape = 'u32[144,128]{1,0:T(1,128)}', space=vmem, size = 0x12000, scoped, tag = 'internal scratch']
  #allocation2 [shape = 'f32[48,1]{1,0:T(8,128)}', space=vmem, size = 0x6000, scoped, tag = 'scratch operand']
  #allocation3 [shape = 'f32[48,1]{1,0:T(8,128)}', space=vmem, size = 0x6000, scoped, tag = 'scratch operand']
  %s0 = inlined_call_operand.vmem [shape: bf16[96,128], index: 0, kind: input, shape index: {}]
  %s1 = inlined_call_operand.vmem [shape: bf16[256,128], index: 1, kind: input, shape index: {}]
  %s2 = inlined_call_operand.vmem [shape: f32[96,1], index: 2, kind: output, shape index: {}]
  %s3 = sld [smem:[#allocation0]]
  $region53: #{matching_loss.3} parent=0
    _
  %s5 = ssub.s32 1, %s3
  %s6 = scalar_select 0, %s5, %s3
  loop: start=0, step=1, limit=6
  $region2: #{matching_loss.3} parent=0 // loop_pre_header
    _
  $region3: #{matching_loss.3} parent=0 // loop_header
    %s8 = sphi 0, %s12
    %p9 = scmp.ge.s32.totalorder %s8, 6
    %s15 = sphi 0, %s27
    %s16 = sphi 0, %s23
    %s17 = sphi 0, %s15
    %s18 = sphi 0, %s16
    %s19 = sphi 0, %s17
    %s20 = sphi 0, %s18
    %s30 = sphi 0, %s32
    %s33 = sphi 0, %s30
    %s34 = sphi 0, %s33
    %s50 = sphi 0, %s34
    %s56 = sphi 0, %s58
    %s59 = sphi 0, %s56
    %s60 = sphi 0, %s59
    %s76 = sphi 0, %s60
    %s82 = sphi 0, %s84
    %s85 = sphi 0, %s82
    %s86 = sphi 0, %s85
    %s102 = sphi 0, %s86
  $region4: #{matching_loss.3} parent=0 // loop_header_branch
    %11 = sbr.rel (%p9) target = $region8
  $region5: #{matching_loss.3} parent=0 // loop_body
    %s13 = ssub.s32 %s8, 1
    %s14 = ssub.s32 %s8, 2
    %s21 = sadd.s32 1, %s16
    %p22 = scmp.ge.s32.totalorder %s21, 2
    %s23 = scalar_select %p22, 0, %s21
    %s24 = sadd.s32 1, %s15
    %s25 = scalar_select %p22, %s24, %s15
    %p26 = scmp.ge.s32.totalorder %s25, 2
    %s27 = scalar_select %p26, 0, %s25
    %s28 = ssub.s32 %s15, %s27
    %p29 = scmp.eq.s32.totalorder %s28, 0
    %s31 = sadd.s32 %s30, 1
    %s32 = scalar_select %p29, %s30, %s31
    %p35 = pneg %p29
    %p36 = scmp.eq.s32.totalorder %s8, 3
    %p37 = por %p35, %p36
    %p38 = scmp.ne.s32.totalorder %s30, %s33
    %p39 = scmp.eq.s32.totalorder %s8, 0
    %p40 = por %p38, %p39
    %p41 = scmp.ne.s32.totalorder %s30, %s33
    %p42 = scmp.eq.s32.totalorder %s13, 3
    %p43 = por %p41, %p42
    %p44 = scmp.ne.s32.totalorder %s33, %s34
    %p45 = scmp.eq.s32.totalorder %s13, 0
    %p46 = por %p44, %p45
    %p47 = scmp.ne.s32.totalorder %s33, %s34
    %p48 = scmp.eq.s32.totalorder %s14, 3
    %p49 = por %p47, %p48
    %p51 = scmp.ne.s32.totalorder %s34, %s50
    %p52 = scmp.eq.s32.totalorder %s14, 0
    %p53 = por %p51, %p52
    %s54 = ssub.s32 %s16, %s23
    %p55 = scmp.eq.s32.totalorder %s54, 0
    %s57 = sadd.s32 %s56, 1
    %s58 = scalar_select %p55, %s56, %s57
    %p61 = pneg %p55
    %p62 = scmp.eq.s32.totalorder %s8, 3
    %p63 = por %p61, %p62
    %p64 = scmp.ne.s32.totalorder %s56, %s59
    %p65 = scmp.eq.s32.totalorder %s8, 0
    %p66 = por %p64, %p65
    %p67 = scmp.ne.s32.totalorder %s56, %s59
    %p68 = scmp.eq.s32.totalorder %s13, 3
    %p69 = por %p67, %p68
    %p70 = scmp.ne.s32.totalorder %s59, %s60
    %p71 = scmp.eq.s32.totalorder %s13, 0
    %p72 = por %p70, %p71
    %p73 = scmp.ne.s32.totalorder %s59, %s60
    %p74 = scmp.eq.s32.totalorder %s14, 3
    %p75 = por %p73, %p74
    %p77 = scmp.ne.s32.totalorder %s60, %s76
    %p78 = scmp.eq.s32.totalorder %s14, 0
    %p79 = por %p77, %p78
    %s80 = ssub.s32 %s15, %s27
    %p81 = scmp.eq.s32.totalorder %s80, 0
    %s83 = sadd.s32 %s82, 1
    %s84 = scalar_select %p81, %s82, %s83
    %p87 = pneg %p81
    %p88 = scmp.eq.s32.totalorder %s8, 3
    %p89 = por %p87, %p88
    %p90 = scmp.ne.s32.totalorder %s82, %s85
    %p91 = scmp.eq.s32.totalorder %s8, 0
    %p92 = por %p90, %p91
    %p93 = scmp.ne.s32.totalorder %s82, %s85
    %p94 = scmp.eq.s32.totalorder %s13, 3
    %p95 = por %p93, %p94
    %p96 = scmp.ne.s32.totalorder %s85, %s86
    %p97 = scmp.eq.s32.totalorder %s13, 0
    %p98 = por %p96, %p97
    %p99 = scmp.ne.s32.totalorder %s85, %s86
    %p100 = scmp.eq.s32.totalorder %s14, 3
    %p101 = por %p99, %p100
    %p103 = scmp.ne.s32.totalorder %s86, %s102
    %p104 = scmp.eq.s32.totalorder %s14, 0
    %p105 = por %p103, %p104
    %p106 = scmp.le.s32.totalorder 1, %s8
    %p107 = scmp.lt.s32.totalorder %s8, 5
    %p108 = pnand %p106, %p107
    %p109 = pneg %p108
    // Predicated region
    $region9: #{matching_loss.3} parent=5 // pred_check
      _
    $region10: #{matching_loss.3} parent=5 // pred_check_branch
      %111 = sbr.rel (%p108) target = $region12
    $region11: #{matching_loss.3} parent=5 // pred_region
      %s112 = ssub.s32 %s8, 1
    $region12: #{matching_loss.3} parent=5 // pred_fallthru
      _
    %p113 = scmp.lt.s32.totalorder %s8, 4
    // Predicated region
    $region13: #{matching_loss.3} parent=5 // pred_check
      %p114 = pneg %p113
    $region14: #{matching_loss.3} parent=5 // pred_check_branch
      %116 = sbr.rel (%p114) target = $region16
    $region15: #{matching_loss.3} parent=5 // pred_region
      // Predicated region
      $region17: #{matching_loss.3} parent=15 // pred_check
        %p117 = pneg %p40
      $region18: #{matching_loss.3} parent=15 // pred_check_branch
        %119 = sbr.rel (%p117) target = $region20
      $region19: #{matching_loss.3} parent=15 // pred_region
        %s120 = smul.u32 6, %s15
        %p121 = scmp.lt.s32.totalorder %s120, 11
        %s122 = scalar_select %p121, %s120, 11
        %s123 = smul.addr %s122, 4
        %s124 = scalar_lea.vmem %s0, %s123
        %s125 = smul.u32 6, %s15
      $region20: #{matching_loss.3} parent=15 // pred_fallthru
        _
      // Predicated region
      $region21: #{matching_loss.3} parent=15 // pred_check
        %p126 = pneg %p66
      $region22: #{matching_loss.3} parent=15 // pred_check_branch
        %128 = sbr.rel (%p126) target = $region24
      $region23: #{matching_loss.3} parent=15 // pred_region
        %s129 = smul.u32 16, %s16
        %p130 = scmp.lt.s32.totalorder %s129, 31
        %s131 = scalar_select %p130, %s129, 31
        %s132 = smul.addr %s131, 4
        %s133 = scalar_lea.vmem %s1, %s132
        %s134 = smul.u32 16, %s16
      $region24: #{matching_loss.3} parent=15 // pred_fallthru
        _
    $region16: #{matching_loss.3} parent=5 // pred_fallthru
      _
    %p135 = scmp.le.s32.totalorder 1, %s8
    %p136 = scmp.lt.s32.totalorder %s8, 5
    %p137 = pnand %p135, %p136
    %p138 = pneg %p137
    // Predicated region
    $region25: #{matching_loss.3} parent=5 // pred_check
      _
    $region26: #{matching_loss.3} parent=5 // pred_check_branch
      %140 = sbr.rel (%p137) target = $region28
    $region27: #{matching_loss.3} parent=5 // pred_region
      %s141 = ssub.s32 %s8, 1
      %s142 = smul.u32 6, %s17
      %p143 = scmp.lt.s32.totalorder %s142, 11
      %s144 = scalar_select %p143, %s142, 11
      %s145 = smul.addr %s144, 4
      %s146 = scalar_lea.vmem %s0, %s145
      %p147 = pneg %p46
      %p148 = pneg %p43
      %s149 = smul.u32 16, %s18
      %p150 = scmp.lt.s32.totalorder %s149, 31
      %s151 = scalar_select %p150, %s149, 31
      %s152 = smul.addr %s151, 4
      %s153 = scalar_lea.vmem %s1, %s152
      %p154 = pneg %p72
      %p155 = pneg %p69
      %p156 = pneg %p98
      %p157 = pneg %p95
      %s158 = smul.u32 6, %s17
      %p159 = scmp.lt.s32.totalorder %s158, 11
      %s160 = scalar_select %p159, %s158, 11
      %s161 = smul.addr %s160, 8
      %s162 = scalar_lea.vmem %s2, %s161
      %s163 = smul.u32 6, %s17
      %p164 = scmp.lt.s32.totalorder %s163, 11
      %s165 = scalar_select %p164, %s163, 11
      %s166 = smul.addr %s165, 4
      %s167 = scalar_lea.vmem %s0, %s166
      %s168 = smul.u32 6, %s17
      %s169 = smul.u32 16, %s18
      %p170 = scmp.lt.s32.totalorder %s169, 31
      %s171 = scalar_select %p170, %s169, 31
      %s172 = smul.addr %s171, 4
      %s173 = scalar_lea.vmem %s1, %s172
      %s174 = smul.u32 16, %s18
      %s175 = smul.u32 6, %s17
      %p176 = scmp.lt.s32.totalorder %s175, 11
      %s177 = scalar_select %p176, %s175, 11
      %s178 = smul.addr %s177, 8
      %s179 = scalar_lea.vmem %s2, %s178
      %s180 = smul.u32 6, %s17
      %p182 = scmp.eq.s32.totalorder %s18, 0
      // Predicated region
      $region29: #{matching_loss.3} parent=27 // pred_check
        %p183 = pneg %p182
      $region30: #{matching_loss.3} parent=27 // pred_check_branch
        %185 = sbr.rel (%p183) target = $region32
      $region31: #{matching_loss.3} parent=27 // pred_region
        %vm186 = vcmask 7168
        %187 = vst.msk [vmem:[#allocation2] sm:$0xff] %vm186, -inf
        %188 = vst.msk [vmem:[#allocation2 + $0x8] sm:$0xff] %vm186, -inf
        %189 = vst.msk [vmem:[#allocation2 + $0x10] sm:$0xff] %vm186, -inf
        %190 = vst.msk [vmem:[#allocation2 + $0x18] sm:$0xff] %vm186, -inf
        %191 = vst.msk [vmem:[#allocation2 + $0x20] sm:$0xff] %vm186, -inf
        %192 = vst.msk [vmem:[#allocation2 + $0x28] sm:$0xff] %vm186, -inf
        %193 = vst.msk [vmem:[#allocation3] sm:$0xff] %vm186, 0.0
        %194 = vst.msk [vmem:[#allocation3 + $0x8] sm:$0xff] %vm186, 0.0
        %195 = vst.msk [vmem:[#allocation3 + $0x10] sm:$0xff] %vm186, 0.0
        %196 = vst.msk [vmem:[#allocation3 + $0x18] sm:$0xff] %vm186, 0.0
        %197 = vst.msk [vmem:[#allocation3 + $0x20] sm:$0xff] %vm186, 0.0
        %198 = vst.msk [vmem:[#allocation3 + $0x28] sm:$0xff] %vm186, 0.0
      $region32: #{matching_loss.3} parent=27 // pred_fallthru
        _
      %v199 = vld [vmem:[%s167] sm:$0xf]
      %v200 = vld [vmem:[%s167 + $0x4] sm:$0xf]
      %v201 = vld [vmem:[%s167 + $0x8] sm:$0xf]
      %v202 = vld [vmem:[%s167 + $0xc] sm:$0xf]
      %v203 = vld [vmem:[%s167 + $0x10] sm:$0xf]
      %v204 = vld [vmem:[%s167 + $0x14] sm:$0xf]
      %v205 = vld [vmem:[%s173] sm:$0xf]
      %v206 = vld [vmem:[%s173 + $0x4] sm:$0xf]
      %v207 = vld [vmem:[%s173 + $0x8] sm:$0xf]
      %v208 = vld [vmem:[%s173 + $0xc] sm:$0xf]
      %v209 = vld [vmem:[%s173 + $0x10] sm:$0xf]
      %v210 = vld [vmem:[%s173 + $0x14] sm:$0xf]
      %v211 = vld [vmem:[%s173 + $0x18] sm:$0xf]
      %v212 = vld [vmem:[%s173 + $0x1c] sm:$0xf]
      %v213 = vld [vmem:[%s173 + $0x20] sm:$0xf]
      %v214 = vld [vmem:[%s173 + $0x24] sm:$0xf]
      %v215 = vld [vmem:[%s173 + $0x28] sm:$0xf]
      %v216 = vld [vmem:[%s173 + $0x2c] sm:$0xf]
      %v217 = vld [vmem:[%s173 + $0x30] sm:$0xf]
      %v218 = vld [vmem:[%s173 + $0x34] sm:$0xf]
      %v219 = vld [vmem:[%s173 + $0x38] sm:$0xf]
      %v220 = vld [vmem:[%s173 + $0x3c] sm:$0xf]
      %v227 = vunpack.c.l.b16 %v199
      %v228 = vunpack.c.l.b16 %v200
      %v229 = vunpack.c.l.b16 %v201
      %v230 = vunpack.c.l.b16 %v202
      %v231 = vunpack.c.l.b16 %v203
      %v232 = vunpack.c.l.b16 %v204
      %v233 = vpack.c.b16 %v228, %v227
      %v234 = vpack.c.b16 %v230, %v229
      %v235 = vpack.c.b16 %v232, %v231
      %v255 = vunpack.c.l.b16 %v205
      %v256 = vunpack.c.l.b16 %v206
      %v257 = vunpack.c.l.b16 %v207
      %v258 = vunpack.c.l.b16 %v208
      %v259 = vunpack.c.l.b16 %v209
      %v260 = vunpack.c.l.b16 %v210
      %v261 = vunpack.c.l.b16 %v211
      %v262 = vunpack.c.l.b16 %v212
      %v263 = vunpack.c.l.b16 %v213
      %v264 = vunpack.c.l.b16 %v214
      %v265 = vunpack.c.l.b16 %v215
      %v266 = vunpack.c.l.b16 %v216
      %v267 = vunpack.c.l.b16 %v217
      %v268 = vunpack.c.l.b16 %v218
      %v269 = vunpack.c.l.b16 %v219
      %v270 = vunpack.c.l.b16 %v220
      %v271 = vpack.c.b16 %v256, %v255
      %v272 = vpack.c.b16 %v258, %v257
      %v273 = vpack.c.b16 %v260, %v259
      %v274 = vpack.c.b16 %v262, %v261
      %v275 = vpack.c.b16 %v264, %v263
      %v276 = vpack.c.b16 %v266, %v265
      %v277 = vpack.c.b16 %v268, %v267
      %v278 = vpack.c.b16 %v270, %v269
      %287 = vmatprep.subr.bf16.mxu0 0
      %288 = vmatpush1.bf16.xpose.msra.mxu0 %v271
      %289 = vmatprep.subr.bf16.mxu0 0
      %290 = vmatpush1.bf16.xpose.msra.mxu0 %v272
      %291 = vmatprep.subr.bf16.mxu0 0
      %292 = vmatpush1.bf16.xpose.msra.mxu0 %v273
      %293 = vmatprep.subr.bf16.mxu0 0
      %294 = vmatpush1.bf16.xpose.msra.mxu0 %v274
      %295 = vmatprep.subr.bf16.mxu0 0
      %296 = vmatpush1.bf16.xpose.msra.mxu0 %v275
      %297 = vmatprep.subr.bf16.mxu0 0
      %298 = vmatpush1.bf16.xpose.msra.mxu0 %v276
      %299 = vmatprep.subr.bf16.mxu0 0
      %300 = vmatpush1.bf16.xpose.msra.mxu0 %v277
      %301 = vmatprep.subr.bf16.mxu0 0
      %302 = vmatpush1.bf16.xpose.msra.mxu0 %v278
      %303 = vmatprep.subr.bf16.mxu0 0
      %304 = vmatpush1.bf16.xpose.msra.mxu0 0
      %305 = vmatprep.subr.bf16.mxu0 0
      %306 = vmatpush1.bf16.xpose.msra.mxu0 0
      %307 = vmatprep.subr.bf16.mxu0 0
      %308 = vmatpush1.bf16.xpose.msra.mxu0 0
      %309 = vmatprep.subr.bf16.mxu0 0
      %310 = vmatpush1.bf16.xpose.msra.mxu0 0
      %311 = vmatprep.subr.bf16.mxu0 0
      %312 = vmatpush1.bf16.xpose.msra.mxu0 0
      %313 = vmatprep.subr.bf16.mxu0 0
      %314 = vmatpush1.bf16.xpose.msra.mxu0 0
      %315 = vmatprep.subr.bf16.mxu0 0
      %316 = vmatpush1.bf16.xpose.msra.mxu0 0
      %317 = vmatprep.subr.bf16.mxu0 0
      %318 = vmatpush1.bf16.xpose.msra.mxu0 0
      %319 = vmatprep.mubr.bf16.mxu0 0
      %320 = vmatmul.mubr.bf16.gmra.mrb[0].mxu0 %v233
      %v321 = vpop.f32.mrb[0].mxu0
      %v322 = vadd.f32 0.0, %v321
      %v323 = vpop.f32.mrb[0].mxu0
      %v324 = vpop.f32.mrb[0].mxu0
      %v325 = vadd.f32 0.0, %v324
      %v326 = vpop.f32.mrb[0].mxu0
      %327 = vmatprep.mubr.bf16.mxu0 0
      %328 = vmatmul.mubr.bf16.gmra.mrb[0].mxu0 %v234
      %v329 = vpop.f32.mrb[0].mxu0
      %v330 = vadd.f32 0.0, %v329
      %v331 = vpop.f32.mrb[0].mxu0
      %v332 = vpop.f32.mrb[0].mxu0
      %v333 = vadd.f32 0.0, %v332
      %v334 = vpop.f32.mrb[0].mxu0
      %335 = vmatprep.mubr.bf16.mxu0 0
      %336 = vmatmul.mubr.bf16.gmra.mrb[0].mxu0 %v235
      %v337 = vpop.f32.mrb[0].mxu0
      %v338 = vadd.f32 0.0, %v337
      %v339 = vpop.f32.mrb[0].mxu0
      %v340 = vpop.f32.mrb[0].mxu0
      %v341 = vadd.f32 0.0, %v340
      %v342 = vpop.f32.mrb[0].mxu0
      %343 = vdwg.mxu0
      %p344 = scmp.lt.s32.totalorder %s18, 1
      // Predicated region
      $region33: #{matching_loss.3} parent=27 // pred_check
        %p345 = pneg %p344
      $region34: #{matching_loss.3} parent=27 // pred_check_branch
        %347 = sbr.rel (%p345) target = $region36
      $region35: #{matching_loss.3} parent=27 // pred_region
        %v348 = vld [vmem:[#allocation2] sm:$0xff]
        %v349 = vld [vmem:[#allocation2 + $0x8] sm:$0xff]
        %v350 = vld [vmem:[#allocation2 + $0x10] sm:$0xff]
        %v351 = vld [vmem:[#allocation2 + $0x18] sm:$0xff]
        %v352 = vld [vmem:[#allocation2 + $0x20] sm:$0xff]
        %v353 = vld [vmem:[#allocation2 + $0x28] sm:$0xff]
        %354 = vmax.xlane.f32.xlu0 %v322
        %v355 = vpop.xlane.xlu0 %354
        %356 = vmax.xlane.f32.xlu0 %v325
        %v357 = vpop.xlane.xlu0 %356
        %358 = vmax.xlane.f32.xlu0 %v330
        %v359 = vpop.xlane.xlu0 %358
        %360 = vmax.xlane.f32.xlu0 %v333
        %v361 = vpop.xlane.xlu0 %360
        %362 = vmax.xlane.f32.xlu0 %v338
        %v363 = vpop.xlane.xlu0 %362
        %364 = vmax.xlane.f32.xlu0 %v341
        %v365 = vpop.xlane.xlu0 %364
        %v366 = vmax.f32 %v348, %v355
        %v367 = vmax.f32 %v349, %v357
        %v368 = vmax.f32 %v350, %v359
        %v369 = vmax.f32 %v351, %v361
        %v370 = vmax.f32 %v352, %v363
        %v371 = vmax.f32 %v353, %v365
        %v372 = vld [vmem:[#allocation3] sm:$0xff]
        %v373 = vld [vmem:[#allocation3 + $0x8] sm:$0xff]
        %v374 = vld [vmem:[#allocation3 + $0x10] sm:$0xff]
        %v375 = vld [vmem:[#allocation3 + $0x18] sm:$0xff]
        %v376 = vld [vmem:[#allocation3 + $0x20] sm:$0xff]
        %v377 = vld [vmem:[#allocation3 + $0x28] sm:$0xff]
        %v378 = vsub.f32 %v348, %v366
        %v379 = vsub.f32 %v349, %v367
        %v380 = vsub.f32 %v350, %v368
        %v381 = vsub.f32 %v351, %v369
        %v382 = vsub.f32 %v352, %v370
        %v383 = vsub.f32 %v353, %v371
        %v384 = vmul.f32 %v378, 1.442695
        %v385 = vpow.pop %v384
        %v386 = vmul.f32 %v379, 1.442695
        %v387 = vpow.pop %v386
        %v388 = vmul.f32 %v380, 1.442695
        %v389 = vpow.pop %v388
        %v390 = vmul.f32 %v381, 1.442695
        %v391 = vpow.pop %v390
        %v392 = vmul.f32 %v382, 1.442695
        %v393 = vpow.pop %v392
        %v394 = vmul.f32 %v383, 1.442695
        %v395 = vpow.pop %v394
        %v396 = vmul.f32 %v372, %v385
        %v397 = vmul.f32 %v373, %v387
        %v398 = vmul.f32 %v374, %v389
        %v399 = vmul.f32 %v375, %v391
        %v400 = vmul.f32 %v376, %v393
        %v401 = vmul.f32 %v377, %v395
        %403 = vset.pattern.permute.xlu0 0
        %404 = vperm.xlu0 %403, %v366
        %v405 = vpop.permute.xlu0 %404
        %408 = vset.pattern.permute.xlu0 0
        %409 = vperm.xlu0 %408, %v367
        %v410 = vpop.permute.xlu0 %409
        %413 = vset.pattern.permute.xlu0 0
        %414 = vperm.xlu0 %413, %v368
        %v415 = vpop.permute.xlu0 %414
        %418 = vset.pattern.permute.xlu0 0
        %419 = vperm.xlu0 %418, %v369
        %v420 = vpop.permute.xlu0 %419
        %423 = vset.pattern.permute.xlu0 0
        %424 = vperm.xlu0 %423, %v370
        %v425 = vpop.permute.xlu0 %424
        %428 = vset.pattern.permute.xlu0 0
        %429 = vperm.xlu0 %428, %v371
        %v430 = vpop.permute.xlu0 %429
        %v432 = vsub.f32 %v322, %v405
        %v433 = vsub.f32 %v325, %v410
        %v434 = vsub.f32 %v330, %v415
        %v435 = vsub.f32 %v333, %v420
        %v436 = vsub.f32 %v338, %v425
        %v437 = vsub.f32 %v341, %v430
        %v438 = vmul.f32 %v432, 1.442695
        %v439 = vpow.pop %v438
        %v440 = vmul.f32 %v433, 1.442695
        %v441 = vpow.pop %v440
        %v442 = vmul.f32 %v434, 1.442695
        %v443 = vpow.pop %v442
        %v444 = vmul.f32 %v435, 1.442695
        %v445 = vpow.pop %v444
        %v446 = vmul.f32 %v436, 1.442695
        %v447 = vpow.pop %v446
        %v448 = vmul.f32 %v437, 1.442695
        %v449 = vpow.pop %v448
        %450 = vadd.xlane.f32.xlu0 %v439
        %v451 = vpop.xlane.xlu0 %450
        %452 = vadd.xlane.f32.xlu0 %v441
        %v453 = vpop.xlane.xlu0 %452
        %454 = vadd.xlane.f32.xlu0 %v443
        %v455 = vpop.xlane.xlu0 %454
        %456 = vadd.xlane.f32.xlu0 %v445
        %v457 = vpop.xlane.xlu0 %456
        %458 = vadd.xlane.f32.xlu0 %v447
        %v459 = vpop.xlane.xlu0 %458
        %460 = vadd.xlane.f32.xlu0 %v449
        %v461 = vpop.xlane.xlu0 %460
        %v462 = vadd.f32 %v396, %v451
        %v463 = vadd.f32 %v397, %v453
        %v464 = vadd.f32 %v398, %v455
        %v465 = vadd.f32 %v399, %v457
        %v466 = vadd.f32 %v400, %v459
        %v467 = vadd.f32 %v401, %v461
        %vm468 = vcmask 7168
        %469 = vst.msk [vmem:[#allocation3] sm:$0xff] %vm468, %v462
        %470 = vst.msk [vmem:[#allocation3 + $0x8] sm:$0xff] %vm468, %v463
        %471 = vst.msk [vmem:[#allocation3 + $0x10] sm:$0xff] %vm468, %v464
        %472 = vst.msk [vmem:[#allocation3 + $0x18] sm:$0xff] %vm468, %v465
        %473 = vst.msk [vmem:[#allocation3 + $0x20] sm:$0xff] %vm468, %v466
        %474 = vst.msk [vmem:[#allocation3 + $0x28] sm:$0xff] %vm468, %v467
        %475 = vst.msk [vmem:[#allocation2] sm:$0xff] %vm468, %v366
        %476 = vst.msk [vmem:[#allocation2 + $0x8] sm:$0xff] %vm468, %v367
        %477 = vst.msk [vmem:[#allocation2 + $0x10] sm:$0xff] %vm468, %v368
        %478 = vst.msk [vmem:[#allocation2 + $0x18] sm:$0xff] %vm468, %v369
        %479 = vst.msk [vmem:[#allocation2 + $0x20] sm:$0xff] %vm468, %v370
        %480 = vst.msk [vmem:[#allocation2 + $0x28] sm:$0xff] %vm468, %v371
      $region36: #{matching_loss.3} parent=27 // pred_fallthru
        _
      %p481 = scmp.eq.s32.totalorder %s18, 1
      // Predicated region
      $region37: #{matching_loss.3} parent=27 // pred_check
        %p482 = pneg %p481
      $region38: #{matching_loss.3} parent=27 // pred_check_branch
        %484 = sbr.rel (%p482) target = $region40
      $region39: #{matching_loss.3} parent=27 // pred_region
        %v485 = vlaneseq
        %v486 = vand.u32 %v485, 127
        %vm487 = vcmp.lt.s32.totalorder %v486, 64
        %v488 = vsel %vm487, 1, 0
        %vm489 = vcmp.eq.s32.totalorder %v488, 1
        %v490 = vsel %vm489, %v322, -inf
        %v491 = vsel %vm489, %v325, -inf
        %v492 = vsel %vm489, %v330, -inf
        %v493 = vsel %vm489, %v333, -inf
        %v494 = vsel %vm489, %v338, -inf
        %v495 = vsel %vm489, %v341, -inf
        %v496 = vld [vmem:[#allocation2] sm:$0xff]
        %v497 = vld [vmem:[#allocation2 + $0x8] sm:$0xff]
        %v498 = vld [vmem:[#allocation2 + $0x10] sm:$0xff]
        %v499 = vld [vmem:[#allocation2 + $0x18] sm:$0xff]
        %v500 = vld [vmem:[#allocation2 + $0x20] sm:$0xff]
        %v501 = vld [vmem:[#allocation2 + $0x28] sm:$0xff]
        %502 = vmax.xlane.f32.xlu0 %v490
        %v503 = vpop.xlane.xlu0 %502
        %504 = vmax.xlane.f32.xlu0 %v491
        %v505 = vpop.xlane.xlu0 %504
        %506 = vmax.xlane.f32.xlu0 %v492
        %v507 = vpop.xlane.xlu0 %506
        %508 = vmax.xlane.f32.xlu0 %v493
        %v509 = vpop.xlane.xlu0 %508
        %510 = vmax.xlane.f32.xlu0 %v494
        %v511 = vpop.xlane.xlu0 %510
        %512 = vmax.xlane.f32.xlu0 %v495
        %v513 = vpop.xlane.xlu0 %512
        %v514 = vmax.f32 %v496, %v503
        %v515 = vmax.f32 %v497, %v505
        %v516 = vmax.f32 %v498, %v507
        %v517 = vmax.f32 %v499, %v509
        %v518 = vmax.f32 %v500, %v511
        %v519 = vmax.f32 %v501, %v513
        %v520 = vld [vmem:[#allocation3] sm:$0xff]
        %v521 = vld [vmem:[#allocation3 + $0x8] sm:$0xff]
        %v522 = vld [vmem:[#allocation3 + $0x10] sm:$0xff]
        %v523 = vld [vmem:[#allocation3 + $0x18] sm:$0xff]
        %v524 = vld [vmem:[#allocation3 + $0x20] sm:$0xff]
        %v525 = vld [vmem:[#allocation3 + $0x28] sm:$0xff]
        %v526 = vsub.f32 %v496, %v514
        %v527 = vsub.f32 %v497, %v515
        %v528 = vsub.f32 %v498, %v516
        %v529 = vsub.f32 %v499, %v517
        %v530 = vsub.f32 %v500, %v518
        %v531 = vsub.f32 %v501, %v519
        %v532 = vmul.f32 %v526, 1.442695
        %v533 = vpow.pop %v532
        %v534 = vmul.f32 %v527, 1.442695
        %v535 = vpow.pop %v534
        %v536 = vmul.f32 %v528, 1.442695
        %v537 = vpow.pop %v536
        %v538 = vmul.f32 %v529, 1.442695
        %v539 = vpow.pop %v538
        %v540 = vmul.f32 %v530, 1.442695
        %v541 = vpow.pop %v540
        %v542 = vmul.f32 %v531, 1.442695
        %v543 = vpow.pop %v542
        %v544 = vmul.f32 %v520, %v533
        %v545 = vmul.f32 %v521, %v535
        %v546 = vmul.f32 %v522, %v537
        %v547 = vmul.f32 %v523, %v539
        %v548 = vmul.f32 %v524, %v541
        %v549 = vmul.f32 %v525, %v543
        %551 = vset.pattern.permute.xlu0 0
        %552 = vperm.xlu0 %551, %v514
        %v553 = vpop.permute.xlu0 %552
        %556 = vset.pattern.permute.xlu0 0
        %557 = vperm.xlu0 %556, %v515
        %v558 = vpop.permute.xlu0 %557
        %561 = vset.pattern.permute.xlu0 0
        %562 = vperm.xlu0 %561, %v516
        %v563 = vpop.permute.xlu0 %562
        %566 = vset.pattern.permute.xlu0 0
        %567 = vperm.xlu0 %566, %v517
        %v568 = vpop.permute.xlu0 %567
        %571 = vset.pattern.permute.xlu0 0
        %572 = vperm.xlu0 %571, %v518
        %v573 = vpop.permute.xlu0 %572
        %576 = vset.pattern.permute.xlu0 0
        %577 = vperm.xlu0 %576, %v519
        %v578 = vpop.permute.xlu0 %577
        %v580 = vsub.f32 %v490, %v553
        %v581 = vsub.f32 %v491, %v558
        %v582 = vsub.f32 %v492, %v563
        %v583 = vsub.f32 %v493, %v568
        %v584 = vsub.f32 %v494, %v573
        %v585 = vsub.f32 %v495, %v578
        %v586 = vmul.f32 %v580, 1.442695
        %v587 = vpow.pop %v586
        %v588 = vmul.f32 %v581, 1.442695
        %v589 = vpow.pop %v588
        %v590 = vmul.f32 %v582, 1.442695
        %v591 = vpow.pop %v590
        %v592 = vmul.f32 %v583, 1.442695
        %v593 = vpow.pop %v592
        %v594 = vmul.f32 %v584, 1.442695
        %v595 = vpow.pop %v594
        %v596 = vmul.f32 %v585, 1.442695
        %v597 = vpow.pop %v596
        %598 = vadd.xlane.f32.xlu0 %v587
        %v599 = vpop.xlane.xlu0 %598
        %600 = vadd.xlane.f32.xlu0 %v589
        %v601 = vpop.xlane.xlu0 %600
        %602 = vadd.xlane.f32.xlu0 %v591
        %v603 = vpop.xlane.xlu0 %602
        %604 = vadd.xlane.f32.xlu0 %v593
        %v605 = vpop.xlane.xlu0 %604
        %606 = vadd.xlane.f32.xlu0 %v595
        %v607 = vpop.xlane.xlu0 %606
        %608 = vadd.xlane.f32.xlu0 %v597
        %v609 = vpop.xlane.xlu0 %608
        %v610 = vadd.f32 %v544, %v599
        %v611 = vadd.f32 %v545, %v601
        %v612 = vadd.f32 %v546, %v603
        %v613 = vadd.f32 %v547, %v605
        %v614 = vadd.f32 %v548, %v607
        %v615 = vadd.f32 %v549, %v609
        %vm616 = vcmask 7168
        %617 = vst.msk [vmem:[#allocation3] sm:$0xff] %vm616, %v610
        %618 = vst.msk [vmem:[#allocation3 + $0x8] sm:$0xff] %vm616, %v611
        %619 = vst.msk [vmem:[#allocation3 + $0x10] sm:$0xff] %vm616, %v612
        %620 = vst.msk [vmem:[#allocation3 + $0x18] sm:$0xff] %vm616, %v613
        %621 = vst.msk [vmem:[#allocation3 + $0x20] sm:$0xff] %vm616, %v614
        %622 = vst.msk [vmem:[#allocation3 + $0x28] sm:$0xff] %vm616, %v615
        %623 = vst.msk [vmem:[#allocation2] sm:$0xff] %vm616, %v514
        %624 = vst.msk [vmem:[#allocation2 + $0x8] sm:$0xff] %vm616, %v515
        %625 = vst.msk [vmem:[#allocation2 + $0x10] sm:$0xff] %vm616, %v516
        %626 = vst.msk [vmem:[#allocation2 + $0x18] sm:$0xff] %vm616, %v517
        %627 = vst.msk [vmem:[#allocation2 + $0x20] sm:$0xff] %vm616, %v518
        %628 = vst.msk [vmem:[#allocation2 + $0x28] sm:$0xff] %vm616, %v519
        %v629 = vld [vmem:[#allocation2] sm:$0xff]
        %v630 = vld [vmem:[#allocation2 + $0x8] sm:$0xff]
        %v631 = vld [vmem:[#allocation2 + $0x10] sm:$0xff]
        %v632 = vld [vmem:[#allocation2 + $0x18] sm:$0xff]
        %v633 = vld [vmem:[#allocation2 + $0x20] sm:$0xff]
        %v634 = vld [vmem:[#allocation2 + $0x28] sm:$0xff]
        %v635 = vld [vmem:[#allocation3] sm:$0xff]
        %v636 = vld [vmem:[#allocation3 + $0x8] sm:$0xff]
        %v637 = vld [vmem:[#allocation3 + $0x10] sm:$0xff]
        %v638 = vld [vmem:[#allocation3 + $0x18] sm:$0xff]
        %v639 = vld [vmem:[#allocation3 + $0x20] sm:$0xff]
        %v640 = vld [vmem:[#allocation3 + $0x28] sm:$0xff]
        %v641 = vlog2.pop %v635
        %v642 = vmul.f32 %v641, 0.6931472
        %v643 = vlog2.pop %v636
        %v644 = vmul.f32 %v643, 0.6931472
        %v645 = vlog2.pop %v637
        %v646 = vmul.f32 %v645, 0.6931472
        %v647 = vlog2.pop %v638
        %v648 = vmul.f32 %v647, 0.6931472
        %v649 = vlog2.pop %v639
        %v650 = vmul.f32 %v649, 0.6931472
        %v651 = vlog2.pop %v640
        %v652 = vmul.f32 %v651, 0.6931472
        %v653 = vadd.f32 %v629, %v642
        %v654 = vadd.f32 %v630, %v644
        %v655 = vadd.f32 %v631, %v646
        %v656 = vadd.f32 %v632, %v648
        %v657 = vadd.f32 %v633, %v650
        %v658 = vadd.f32 %v634, %v652
        %659 = vst.msk [vmem:[%s179] sm:$0xff] %vm616, %v653
        %660 = vst.msk [vmem:[%s179 + $0x8] sm:$0xff] %vm616, %v654
        %661 = vst.msk [vmem:[%s179 + $0x10] sm:$0xff] %vm616, %v655
        %662 = vst.msk [vmem:[%s179 + $0x18] sm:$0xff] %vm616, %v656
        %663 = vst.msk [vmem:[%s179 + $0x20] sm:$0xff] %vm616, %v657
        %664 = vst.msk [vmem:[%s179 + $0x28] sm:$0xff] %vm616, %v658
      $region40: #{matching_loss.3} parent=27 // pred_fallthru
        _
      %s665 = smul.u32 6, %s17
      %p666 = scmp.lt.s32.totalorder %s665, 11
      %s667 = scalar_select %p666, %s665, 11
      %s668 = smul.addr %s667, 8
      %s669 = scalar_lea.vmem %s2, %s668
      // Predicated region
      $region41: #{matching_loss.3} parent=27 // pred_check
        %p670 = pneg %p95
      $region42: #{matching_loss.3} parent=27 // pred_check_branch
        %672 = sbr.rel (%p670) target = $region44
      $region43: #{matching_loss.3} parent=27 // pred_region
        %s673 = smul.u32 6, %s17
      $region44: #{matching_loss.3} parent=27 // pred_fallthru
        _
    $region28: #{matching_loss.3} parent=5 // pred_fallthru
      _
    %p674 = scmp.le.s32.totalorder 2, %s8
    // Predicated region
    $region45: #{matching_loss.3} parent=5 // pred_check
      %p675 = pneg %p674
    $region46: #{matching_loss.3} parent=5 // pred_check_branch
      %677 = sbr.rel (%p675) target = $region48
    $region47: #{matching_loss.3} parent=5 // pred_region
      %s678 = ssub.s32 %s8, 2
      // Predicated region
      $region49: #{matching_loss.3} parent=47 // pred_check
        %p679 = pneg %p101
      $region50: #{matching_loss.3} parent=47 // pred_check_branch
        %681 = sbr.rel (%p679) target = $region52
      $region51: #{matching_loss.3} parent=47 // pred_region
        %s682 = smul.u32 6, %s19
        %p683 = scmp.lt.s32.totalorder %s682, 11
        %s684 = scalar_select %p683, %s682, 11
        %s685 = smul.addr %s684, 8
        %s686 = scalar_lea.vmem %s2, %s685
      $region52: #{matching_loss.3} parent=47 // pred_fallthru
        _
    $region48: #{matching_loss.3} parent=5 // pred_fallthru
      _
  $region6: #{matching_loss.3} parent=0 // loop_footer
    %s12 = sadd.s32 1, %s8
  $region7: #{matching_loss.3} parent=0 // loop_footer_branch
    %7 = sbr.rel target = $region3
  $region8: #{matching_loss.3} parent=0 // loop_exit
    _

// kernel: matching_loss.2
$region0: #{matching_loss.2}
  #allocation0 [shape = 'u32[]', space=smem, size = 0x4, offset = 0x4, fixed_abs, tag = 'smem constant byte address 0x4 - core index']
  #allocation1 [shape = 'u32[144,128]{1,0:T(1,128)}', space=vmem, size = 0x12000, scoped, tag = 'internal scratch']
  #allocation2 [shape = 'f32[48,1]{1,0:T(8,128)}', space=vmem, size = 0x6000, scoped, tag = 'scratch operand']
  #allocation3 [shape = 'f32[48,1]{1,0:T(8,128)}', space=vmem, size = 0x6000, scoped, tag = 'scratch operand']
  %s0 = inlined_call_operand.vmem [shape: bf16[96,128], index: 0, kind: input, shape index: {}]
  %s1 = inlined_call_operand.vmem [shape: bf16[256,128], index: 1, kind: input, shape index: {}]
  %s2 = inlined_call_operand.vmem [shape: f32[96,1], index: 2, kind: output, shape index: {}]
  %s3 = sld [smem:[#allocation0]]
  $region53: #{matching_loss.2} parent=0
    _
  %s5 = ssub.s32 1, %s3
  %s6 = scalar_select 0, %s5, %s3
  loop: start=0, step=1, limit=6
  $region2: #{matching_loss.2} parent=0 // loop_pre_header
    _
  $region3: #{matching_loss.2} parent=0 // loop_header
    %s8 = sphi 0, %s12
    %p9 = scmp.ge.s32.totalorder %s8, 6
    %s15 = sphi 0, %s27
    %s16 = sphi 0, %s23
    %s17 = sphi 0, %s15
    %s18 = sphi 0, %s16
    %s19 = sphi 0, %s17
    %s20 = sphi 0, %s18
    %s30 = sphi 0, %s32
    %s33 = sphi 0, %s30
    %s34 = sphi 0, %s33
    %s50 = sphi 0, %s34
    %s56 = sphi 0, %s58
    %s59 = sphi 0, %s56
    %s60 = sphi 0, %s59
    %s76 = sphi 0, %s60
    %s82 = sphi 0, %s84
    %s85 = sphi 0, %s82
    %s86 = sphi 0, %s85
    %s102 = sphi 0, %s86
  $region4: #{matching_loss.2} parent=0 // loop_header_branch
    %11 = sbr.rel (%p9) target = $region8
  $region5: #{matching_loss.2} parent=0 // loop_body
    %s13 = ssub.s32 %s8, 1
    %s14 = ssub.s32 %s8, 2
    %s21 = sadd.s32 1, %s16
    %p22 = scmp.ge.s32.totalorder %s21, 2
    %s23 = scalar_select %p22, 0, %s21
    %s24 = sadd.s32 1, %s15
    %s25 = scalar_select %p22, %s24, %s15
    %p26 = scmp.ge.s32.totalorder %s25, 2
    %s27 = scalar_select %p26, 0, %s25
    %s28 = ssub.s32 %s15, %s27
    %p29 = scmp.eq.s32.totalorder %s28, 0
    %s31 = sadd.s32 %s30, 1
    %s32 = scalar_select %p29, %s30, %s31
    %p35 = pneg %p29
    %p36 = scmp.eq.s32.totalorder %s8, 3
    %p37 = por %p35, %p36
    %p38 = scmp.ne.s32.totalorder %s30, %s33
    %p39 = scmp.eq.s32.totalorder %s8, 0
    %p40 = por %p38, %p39
    %p41 = scmp.ne.s32.totalorder %s30, %s33
    %p42 = scmp.eq.s32.totalorder %s13, 3
    %p43 = por %p41, %p42
    %p44 = scmp.ne.s32.totalorder %s33, %s34
    %p45 = scmp.eq.s32.totalorder %s13, 0
    %p46 = por %p44, %p45
    %p47 = scmp.ne.s32.totalorder %s33, %s34
    %p48 = scmp.eq.s32.totalorder %s14, 3
    %p49 = por %p47, %p48
    %p51 = scmp.ne.s32.totalorder %s34, %s50
    %p52 = scmp.eq.s32.totalorder %s14, 0
    %p53 = por %p51, %p52
    %s54 = ssub.s32 %s16, %s23
    %p55 = scmp.eq.s32.totalorder %s54, 0
    %s57 = sadd.s32 %s56, 1
    %s58 = scalar_select %p55, %s56, %s57
    %p61 = pneg %p55
    %p62 = scmp.eq.s32.totalorder %s8, 3
    %p63 = por %p61, %p62
    %p64 = scmp.ne.s32.totalorder %s56, %s59
    %p65 = scmp.eq.s32.totalorder %s8, 0
    %p66 = por %p64, %p65
    %p67 = scmp.ne.s32.totalorder %s56, %s59
    %p68 = scmp.eq.s32.totalorder %s13, 3
    %p69 = por %p67, %p68
    %p70 = scmp.ne.s32.totalorder %s59, %s60
    %p71 = scmp.eq.s32.totalorder %s13, 0
    %p72 = por %p70, %p71
    %p73 = scmp.ne.s32.totalorder %s59, %s60
    %p74 = scmp.eq.s32.totalorder %s14, 3
    %p75 = por %p73, %p74
    %p77 = scmp.ne.s32.totalorder %s60, %s76
    %p78 = scmp.eq.s32.totalorder %s14, 0
    %p79 = por %p77, %p78
    %s80 = ssub.s32 %s15, %s27
    %p81 = scmp.eq.s32.totalorder %s80, 0
    %s83 = sadd.s32 %s82, 1
    %s84 = scalar_select %p81, %s82, %s83
    %p87 = pneg %p81
    %p88 = scmp.eq.s32.totalorder %s8, 3
    %p89 = por %p87, %p88
    %p90 = scmp.ne.s32.totalorder %s82, %s85
    %p91 = scmp.eq.s32.totalorder %s8, 0
    %p92 = por %p90, %p91
    %p93 = scmp.ne.s32.totalorder %s82, %s85
    %p94 = scmp.eq.s32.totalorder %s13, 3
    %p95 = por %p93, %p94
    %p96 = scmp.ne.s32.totalorder %s85, %s86
    %p97 = scmp.eq.s32.totalorder %s13, 0
    %p98 = por %p96, %p97
    %p99 = scmp.ne.s32.totalorder %s85, %s86
    %p100 = scmp.eq.s32.totalorder %s14, 3
    %p101 = por %p99, %p100
    %p103 = scmp.ne.s32.totalorder %s86, %s102
    %p104 = scmp.eq.s32.totalorder %s14, 0
    %p105 = por %p103, %p104
    %p106 = scmp.le.s32.totalorder 1, %s8
    %p107 = scmp.lt.s32.totalorder %s8, 5
    %p108 = pnand %p106, %p107
    %p109 = pneg %p108
    // Predicated region
    $region9: #{matching_loss.2} parent=5 // pred_check
      _
    $region10: #{matching_loss.2} parent=5 // pred_check_branch
      %111 = sbr.rel (%p108) target = $region12
    $region11: #{matching_loss.2} parent=5 // pred_region
      %s112 = ssub.s32 %s8, 1
    $region12: #{matching_loss.2} parent=5 // pred_fallthru
      _
    %p113 = scmp.lt.s32.totalorder %s8, 4
    // Predicated region
    $region13: #{matching_loss.2} parent=5 // pred_check
      %p114 = pneg %p113
    $region14: #{matching_loss.2} parent=5 // pred_check_branch
      %116 = sbr.rel (%p114) target = $region16
    $region15: #{matching_loss.2} parent=5 // pred_region
      // Predicated region
      $region17: #{matching_loss.2} parent=15 // pred_check
        %p117 = pneg %p40
      $region18: #{matching_loss.2} parent=15 // pred_check_branch
        %119 = sbr.rel (%p117) target = $region20
      $region19: #{matching_loss.2} parent=15 // pred_region
        %s120 = smul.u32 6, %s15
        %p121 = scmp.lt.s32.totalorder %s120, 11
        %s122 = scalar_select %p121, %s120, 11
        %s123 = smul.addr %s122, 4
        %s124 = scalar_lea.vmem %s0, %s123
        %s125 = smul.u32 6, %s15
      $region20: #{matching_loss.2} parent=15 // pred_fallthru
        _
      // Predicated region
      $region21: #{matching_loss.2} parent=15 // pred_check
        %p126 = pneg %p66
      $region22: #{matching_loss.2} parent=15 // pred_check_branch
        %128 = sbr.rel (%p126) target = $region24
      $region23: #{matching_loss.2} parent=15 // pred_region
        %s129 = smul.u32 16, %s16
        %p130 = scmp.lt.s32.totalorder %s129, 31
        %s131 = scalar_select %p130, %s129, 31
        %s132 = smul.addr %s131, 4
        %s133 = scalar_lea.vmem %s1, %s132
        %s134 = smul.u32 16, %s16
      $region24: #{matching_loss.2} parent=15 // pred_fallthru
        _
    $region16: #{matching_loss.2} parent=5 // pred_fallthru
      _
    %p135 = scmp.le.s32.totalorder 1, %s8
    %p136 = scmp.lt.s32.totalorder %s8, 5
    %p137 = pnand %p135, %p136
    %p138 = pneg %p137
    // Predicated region
    $region25: #{matching_loss.2} parent=5 // pred_check
      _
    $region26: #{matching_loss.2} parent=5 // pred_check_branch
      %140 = sbr.rel (%p137) target = $region28
    $region27: #{matching_loss.2} parent=5 // pred_region
      %s141 = ssub.s32 %s8, 1
      %s142 = smul.u32 6, %s17
      %p143 = scmp.lt.s32.totalorder %s142, 11
      %s144 = scalar_select %p143, %s142, 11
      %s145 = smul.addr %s144, 4
      %s146 = scalar_lea.vmem %s0, %s145
      %p147 = pneg %p46
      %p148 = pneg %p43
      %s149 = smul.u32 16, %s18
      %p150 = scmp.lt.s32.totalorder %s149, 31
      %s151 = scalar_select %p150, %s149, 31
      %s152 = smul.addr %s151, 4
      %s153 = scalar_lea.vmem %s1, %s152
      %p154 = pneg %p72
      %p155 = pneg %p69
      %p156 = pneg %p98
      %p157 = pneg %p95
      %s158 = smul.u32 6, %s17
      %p159 = scmp.lt.s32.totalorder %s158, 11
      %s160 = scalar_select %p159, %s158, 11
      %s161 = smul.addr %s160, 8
      %s162 = scalar_lea.vmem %s2, %s161
      %s163 = smul.u32 6, %s17
      %p164 = scmp.lt.s32.totalorder %s163, 11
      %s165 = scalar_select %p164, %s163, 11
      %s166 = smul.addr %s165, 4
      %s167 = scalar_lea.vmem %s0, %s166
      %s168 = smul.u32 6, %s17
      %s169 = smul.u32 16, %s18
      %p170 = scmp.lt.s32.totalorder %s169, 31
      %s171 = scalar_select %p170, %s169, 31
      %s172 = smul.addr %s171, 4
      %s173 = scalar_lea.vmem %s1, %s172
      %s174 = smul.u32 16, %s18
      %s175 = smul.u32 6, %s17
      %p176 = scmp.lt.s32.totalorder %s175, 11
      %s177 = scalar_select %p176, %s175, 11
      %s178 = smul.addr %s177, 8
      %s179 = scalar_lea.vmem %s2, %s178
      %s180 = smul.u32 6, %s17
      %p182 = scmp.eq.s32.totalorder %s18, 0
      // Predicated region
      $region29: #{matching_loss.2} parent=27 // pred_check
        %p183 = pneg %p182
      $region30: #{matching_loss.2} parent=27 // pred_check_branch
        %185 = sbr.rel (%p183) target = $region32
      $region31: #{matching_loss.2} parent=27 // pred_region
        %vm186 = vcmask 7168
        %187 = vst.msk [vmem:[#allocation2] sm:$0xff] %vm186, -inf
        %188 = vst.msk [vmem:[#allocation2 + $0x8] sm:$0xff] %vm186, -inf
        %189 = vst.msk [vmem:[#allocation2 + $0x10] sm:$0xff] %vm186, -inf
        %190 = vst.msk [vmem:[#allocation2 + $0x18] sm:$0xff] %vm186, -inf
        %191 = vst.msk [vmem:[#allocation2 + $0x20] sm:$0xff] %vm186, -inf
        %192 = vst.msk [vmem:[#allocation2 + $0x28] sm:$0xff] %vm186, -inf
        %193 = vst.msk [vmem:[#allocation3] sm:$0xff] %vm186, 0.0
        %194 = vst.msk [vmem:[#allocation3 + $0x8] sm:$0xff] %vm186, 0.0
        %195 = vst.msk [vmem:[#allocation3 + $0x10] sm:$0xff] %vm186, 0.0
        %196 = vst.msk [vmem:[#allocation3 + $0x18] sm:$0xff] %vm186, 0.0
        %197 = vst.msk [vmem:[#allocation3 + $0x20] sm:$0xff] %vm186, 0.0
        %198 = vst.msk [vmem:[#allocation3 + $0x28] sm:$0xff] %vm186, 0.0
      $region32: #{matching_loss.2} parent=27 // pred_fallthru
        _
      %v199 = vld [vmem:[%s167] sm:$0xf]
      %v200 = vld [vmem:[%s167 + $0x4] sm:$0xf]
      %v201 = vld [vmem:[%s167 + $0x8] sm:$0xf]
      %v202 = vld [vmem:[%s167 + $0xc] sm:$0xf]
      %v203 = vld [vmem:[%s167 + $0x10] sm:$0xf]
      %v204 = vld [vmem:[%s167 + $0x14] sm:$0xf]
      %v205 = vld [vmem:[%s173] sm:$0xf]
      %v206 = vld [vmem:[%s173 + $0x4] sm:$0xf]
      %v207 = vld [vmem:[%s173 + $0x8] sm:$0xf]
      %v208 = vld [vmem:[%s173 + $0xc] sm:$0xf]
      %v209 = vld [vmem:[%s173 + $0x10] sm:$0xf]
      %v210 = vld [vmem:[%s173 + $0x14] sm:$0xf]
      %v211 = vld [vmem:[%s173 + $0x18] sm:$0xf]
      %v212 = vld [vmem:[%s173 + $0x1c] sm:$0xf]
      %v213 = vld [vmem:[%s173 + $0x20] sm:$0xf]
      %v214 = vld [vmem:[%s173 + $0x24] sm:$0xf]
      %v215 = vld [vmem:[%s173 + $0x28] sm:$0xf]
      %v216 = vld [vmem:[%s173 + $0x2c] sm:$0xf]
      %v217 = vld [vmem:[%s173 + $0x30] sm:$0xf]
      %v218 = vld [vmem:[%s173 + $0x34] sm:$0xf]
      %v219 = vld [vmem:[%s173 + $0x38] sm:$0xf]
      %v220 = vld [vmem:[%s173 + $0x3c] sm:$0xf]
      %v227 = vunpack.c.l.b16 %v199
      %v228 = vunpack.c.l.b16 %v200
      %v229 = vunpack.c.l.b16 %v201
      %v230 = vunpack.c.l.b16 %v202
      %v231 = vunpack.c.l.b16 %v203
      %v232 = vunpack.c.l.b16 %v204
      %v233 = vpack.c.b16 %v228, %v227
      %v234 = vpack.c.b16 %v230, %v229
      %v235 = vpack.c.b16 %v232, %v231
      %v255 = vunpack.c.l.b16 %v205
      %v256 = vunpack.c.l.b16 %v206
      %v257 = vunpack.c.l.b16 %v207
      %v258 = vunpack.c.l.b16 %v208
      %v259 = vunpack.c.l.b16 %v209
      %v260 = vunpack.c.l.b16 %v210
      %v261 = vunpack.c.l.b16 %v211
      %v262 = vunpack.c.l.b16 %v212
      %v263 = vunpack.c.l.b16 %v213
      %v264 = vunpack.c.l.b16 %v214
      %v265 = vunpack.c.l.b16 %v215
      %v266 = vunpack.c.l.b16 %v216
      %v267 = vunpack.c.l.b16 %v217
      %v268 = vunpack.c.l.b16 %v218
      %v269 = vunpack.c.l.b16 %v219
      %v270 = vunpack.c.l.b16 %v220
      %v271 = vpack.c.b16 %v256, %v255
      %v272 = vpack.c.b16 %v258, %v257
      %v273 = vpack.c.b16 %v260, %v259
      %v274 = vpack.c.b16 %v262, %v261
      %v275 = vpack.c.b16 %v264, %v263
      %v276 = vpack.c.b16 %v266, %v265
      %v277 = vpack.c.b16 %v268, %v267
      %v278 = vpack.c.b16 %v270, %v269
      %287 = vmatprep.subr.bf16.mxu0 0
      %288 = vmatpush1.bf16.xpose.msra.mxu0 %v271
      %289 = vmatprep.subr.bf16.mxu0 0
      %290 = vmatpush1.bf16.xpose.msra.mxu0 %v272
      %291 = vmatprep.subr.bf16.mxu0 0
      %292 = vmatpush1.bf16.xpose.msra.mxu0 %v273
      %293 = vmatprep.subr.bf16.mxu0 0
      %294 = vmatpush1.bf16.xpose.msra.mxu0 %v274
      %295 = vmatprep.subr.bf16.mxu0 0
      %296 = vmatpush1.bf16.xpose.msra.mxu0 %v275
      %297 = vmatprep.subr.bf16.mxu0 0
      %298 = vmatpush1.bf16.xpose.msra.mxu0 %v276
      %299 = vmatprep.subr.bf16.mxu0 0
      %300 = vmatpush1.bf16.xpose.msra.mxu0 %v277
      %301 = vmatprep.subr.bf16.mxu0 0
      %302 = vmatpush1.bf16.xpose.msra.mxu0 %v278
      %303 = vmatprep.subr.bf16.mxu0 0
      %304 = vmatpush1.bf16.xpose.msra.mxu0 0
      %305 = vmatprep.subr.bf16.mxu0 0
      %306 = vmatpush1.bf16.xpose.msra.mxu0 0
      %307 = vmatprep.subr.bf16.mxu0 0
      %308 = vmatpush1.bf16.xpose.msra.mxu0 0
      %309 = vmatprep.subr.bf16.mxu0 0
      %310 = vmatpush1.bf16.xpose.msra.mxu0 0
      %311 = vmatprep.subr.bf16.mxu0 0
      %312 = vmatpush1.bf16.xpose.msra.mxu0 0
      %313 = vmatprep.subr.bf16.mxu0 0
      %314 = vmatpush1.bf16.xpose.msra.mxu0 0
      %315 = vmatprep.subr.bf16.mxu0 0
      %316 = vmatpush1.bf16.xpose.msra.mxu0 0
      %317 = vmatprep.subr.bf16.mxu0 0
      %318 = vmatpush1.bf16.xpose.msra.mxu0 0
      %319 = vmatprep.mubr.bf16.mxu0 0
      %320 = vmatmul.mubr.bf16.gmra.mrb[0].mxu0 %v233
      %v321 = vpop.f32.mrb[0].mxu0
      %v322 = vadd.f32 0.0, %v321
      %v323 = vpop.f32.mrb[0].mxu0
      %v324 = vpop.f32.mrb[0].mxu0
      %v325 = vadd.f32 0.0, %v324
      %v326 = vpop.f32.mrb[0].mxu0
      %327 = vmatprep.mubr.bf16.mxu0 0
      %328 = vmatmul.mubr.bf16.gmra.mrb[0].mxu0 %v234
      %v329 = vpop.f32.mrb[0].mxu0
      %v330 = vadd.f32 0.0, %v329
      %v331 = vpop.f32.mrb[0].mxu0
      %v332 = vpop.f32.mrb[0].mxu0
      %v333 = vadd.f32 0.0, %v332
      %v334 = vpop.f32.mrb[0].mxu0
      %335 = vmatprep.mubr.bf16.mxu0 0
      %336 = vmatmul.mubr.bf16.gmra.mrb[0].mxu0 %v235
      %v337 = vpop.f32.mrb[0].mxu0
      %v338 = vadd.f32 0.0, %v337
      %v339 = vpop.f32.mrb[0].mxu0
      %v340 = vpop.f32.mrb[0].mxu0
      %v341 = vadd.f32 0.0, %v340
      %v342 = vpop.f32.mrb[0].mxu0
      %343 = vdwg.mxu0
      %p344 = scmp.lt.s32.totalorder %s18, 1
      // Predicated region
      $region33: #{matching_loss.2} parent=27 // pred_check
        %p345 = pneg %p344
      $region34: #{matching_loss.2} parent=27 // pred_check_branch
        %347 = sbr.rel (%p345) target = $region36
      $region35: #{matching_loss.2} parent=27 // pred_region
        %v348 = vld [vmem:[#allocation2] sm:$0xff]
        %v349 = vld [vmem:[#allocation2 + $0x8] sm:$0xff]
        %v350 = vld [vmem:[#allocation2 + $0x10] sm:$0xff]
        %v351 = vld [vmem:[#allocation2 + $0x18] sm:$0xff]
        %v352 = vld [vmem:[#allocation2 + $0x20] sm:$0xff]
        %v353 = vld [vmem:[#allocation2 + $0x28] sm:$0xff]
        %354 = vmax.xlane.f32.xlu0 %v322
        %v355 = vpop.xlane.xlu0 %354
        %356 = vmax.xlane.f32.xlu0 %v325
        %v357 = vpop.xlane.xlu0 %356
        %358 = vmax.xlane.f32.xlu0 %v330
        %v359 = vpop.xlane.xlu0 %358
        %360 = vmax.xlane.f32.xlu0 %v333
        %v361 = vpop.xlane.xlu0 %360
        %362 = vmax.xlane.f32.xlu0 %v338
        %v363 = vpop.xlane.xlu0 %362
        %364 = vmax.xlane.f32.xlu0 %v341
        %v365 = vpop.xlane.xlu0 %364
        %v366 = vmax.f32 %v348, %v355
        %v367 = vmax.f32 %v349, %v357
        %v368 = vmax.f32 %v350, %v359
        %v369 = vmax.f32 %v351, %v361
        %v370 = vmax.f32 %v352, %v363
        %v371 = vmax.f32 %v353, %v365
        %v372 = vld [vmem:[#allocation3] sm:$0xff]
        %v373 = vld [vmem:[#allocation3 + $0x8] sm:$0xff]
        %v374 = vld [vmem:[#allocation3 + $0x10] sm:$0xff]
        %v375 = vld [vmem:[#allocation3 + $0x18] sm:$0xff]
        %v376 = vld [vmem:[#allocation3 + $0x20] sm:$0xff]
        %v377 = vld [vmem:[#allocation3 + $0x28] sm:$0xff]
        %v378 = vsub.f32 %v348, %v366
        %v379 = vsub.f32 %v349, %v367
        %v380 = vsub.f32 %v350, %v368
        %v381 = vsub.f32 %v351, %v369
        %v382 = vsub.f32 %v352, %v370
        %v383 = vsub.f32 %v353, %v371
        %v384 = vmul.f32 %v378, 1.442695
        %v385 = vpow.pop %v384
        %v386 = vmul.f32 %v379, 1.442695
        %v387 = vpow.pop %v386
        %v388 = vmul.f32 %v380, 1.442695
        %v389 = vpow.pop %v388
        %v390 = vmul.f32 %v381, 1.442695
        %v391 = vpow.pop %v390
        %v392 = vmul.f32 %v382, 1.442695
        %v393 = vpow.pop %v392
        %v394 = vmul.f32 %v383, 1.442695
        %v395 = vpow.pop %v394
        %v396 = vmul.f32 %v372, %v385
        %v397 = vmul.f32 %v373, %v387
        %v398 = vmul.f32 %v374, %v389
        %v399 = vmul.f32 %v375, %v391
        %v400 = vmul.f32 %v376, %v393
        %v401 = vmul.f32 %v377, %v395
        %403 = vset.pattern.permute.xlu0 0
        %404 = vperm.xlu0 %403, %v366
        %v405 = vpop.permute.xlu0 %404
        %408 = vset.pattern.permute.xlu0 0
        %409 = vperm.xlu0 %408, %v367
        %v410 = vpop.permute.xlu0 %409
        %413 = vset.pattern.permute.xlu0 0
        %414 = vperm.xlu0 %413, %v368
        %v415 = vpop.permute.xlu0 %414
        %418 = vset.pattern.permute.xlu0 0
        %419 = vperm.xlu0 %418, %v369
        %v420 = vpop.permute.xlu0 %419
        %423 = vset.pattern.permute.xlu0 0
        %424 = vperm.xlu0 %423, %v370
        %v425 = vpop.permute.xlu0 %424
        %428 = vset.pattern.permute.xlu0 0
        %429 = vperm.xlu0 %428, %v371
        %v430 = vpop.permute.xlu0 %429
        %v432 = vsub.f32 %v322, %v405
        %v433 = vsub.f32 %v325, %v410
        %v434 = vsub.f32 %v330, %v415
        %v435 = vsub.f32 %v333, %v420
        %v436 = vsub.f32 %v338, %v425
        %v437 = vsub.f32 %v341, %v430
        %v438 = vmul.f32 %v432, 1.442695
        %v439 = vpow.pop %v438
        %v440 = vmul.f32 %v433, 1.442695
        %v441 = vpow.pop %v440
        %v442 = vmul.f32 %v434, 1.442695
        %v443 = vpow.pop %v442
        %v444 = vmul.f32 %v435, 1.442695
        %v445 = vpow.pop %v444
        %v446 = vmul.f32 %v436, 1.442695
        %v447 = vpow.pop %v446
        %v448 = vmul.f32 %v437, 1.442695
        %v449 = vpow.pop %v448
        %450 = vadd.xlane.f32.xlu0 %v439
        %v451 = vpop.xlane.xlu0 %450
        %452 = vadd.xlane.f32.xlu0 %v441
        %v453 = vpop.xlane.xlu0 %452
        %454 = vadd.xlane.f32.xlu0 %v443
        %v455 = vpop.xlane.xlu0 %454
        %456 = vadd.xlane.f32.xlu0 %v445
        %v457 = vpop.xlane.xlu0 %456
        %458 = vadd.xlane.f32.xlu0 %v447
        %v459 = vpop.xlane.xlu0 %458
        %460 = vadd.xlane.f32.xlu0 %v449
        %v461 = vpop.xlane.xlu0 %460
        %v462 = vadd.f32 %v396, %v451
        %v463 = vadd.f32 %v397, %v453
        %v464 = vadd.f32 %v398, %v455
        %v465 = vadd.f32 %v399, %v457
        %v466 = vadd.f32 %v400, %v459
        %v467 = vadd.f32 %v401, %v461
        %vm468 = vcmask 7168
        %469 = vst.msk [vmem:[#allocation3] sm:$0xff] %vm468, %v462
        %470 = vst.msk [vmem:[#allocation3 + $0x8] sm:$0xff] %vm468, %v463
        %471 = vst.msk [vmem:[#allocation3 + $0x10] sm:$0xff] %vm468, %v464
        %472 = vst.msk [vmem:[#allocation3 + $0x18] sm:$0xff] %vm468, %v465
        %473 = vst.msk [vmem:[#allocation3 + $0x20] sm:$0xff] %vm468, %v466
        %474 = vst.msk [vmem:[#allocation3 + $0x28] sm:$0xff] %vm468, %v467
        %475 = vst.msk [vmem:[#allocation2] sm:$0xff] %vm468, %v366
        %476 = vst.msk [vmem:[#allocation2 + $0x8] sm:$0xff] %vm468, %v367
        %477 = vst.msk [vmem:[#allocation2 + $0x10] sm:$0xff] %vm468, %v368
        %478 = vst.msk [vmem:[#allocation2 + $0x18] sm:$0xff] %vm468, %v369
        %479 = vst.msk [vmem:[#allocation2 + $0x20] sm:$0xff] %vm468, %v370
        %480 = vst.msk [vmem:[#allocation2 + $0x28] sm:$0xff] %vm468, %v371
      $region36: #{matching_loss.2} parent=27 // pred_fallthru
        _
      %p481 = scmp.eq.s32.totalorder %s18, 1
      // Predicated region
      $region37: #{matching_loss.2} parent=27 // pred_check
        %p482 = pneg %p481
      $region38: #{matching_loss.2} parent=27 // pred_check_branch
        %484 = sbr.rel (%p482) target = $region40
      $region39: #{matching_loss.2} parent=27 // pred_region
        %v485 = vlaneseq
        %v486 = vand.u32 %v485, 127
        %vm487 = vcmp.lt.s32.totalorder %v486, 32
        %v488 = vsel %vm487, 1, 0
        %vm489 = vcmp.eq.s32.totalorder %v488, 1
        %v490 = vsel %vm489, %v322, -inf
        %v491 = vsel %vm489, %v325, -inf
        %v492 = vsel %vm489, %v330, -inf
        %v493 = vsel %vm489, %v333, -inf
        %v494 = vsel %vm489, %v338, -inf
        %v495 = vsel %vm489, %v341, -inf
        %v496 = vld [vmem:[#allocation2] sm:$0xff]
        %v497 = vld [vmem:[#allocation2 + $0x8] sm:$0xff]
        %v498 = vld [vmem:[#allocation2 + $0x10] sm:$0xff]
        %v499 = vld [vmem:[#allocation2 + $0x18] sm:$0xff]
        %v500 = vld [vmem:[#allocation2 + $0x20] sm:$0xff]
        %v501 = vld [vmem:[#allocation2 + $0x28] sm:$0xff]
        %502 = vmax.xlane.f32.xlu0 %v490
        %v503 = vpop.xlane.xlu0 %502
        %504 = vmax.xlane.f32.xlu0 %v491
        %v505 = vpop.xlane.xlu0 %504
        %506 = vmax.xlane.f32.xlu0 %v492
        %v507 = vpop.xlane.xlu0 %506
        %508 = vmax.xlane.f32.xlu0 %v493
        %v509 = vpop.xlane.xlu0 %508
        %510 = vmax.xlane.f32.xlu0 %v494
        %v511 = vpop.xlane.xlu0 %510
        %512 = vmax.xlane.f32.xlu0 %v495
        %v513 = vpop.xlane.xlu0 %512
        %v514 = vmax.f32 %v496, %v503
        %v515 = vmax.f32 %v497, %v505
        %v516 = vmax.f32 %v498, %v507
        %v517 = vmax.f32 %v499, %v509
        %v518 = vmax.f32 %v500, %v511
        %v519 = vmax.f32 %v501, %v513
        %v520 = vld [vmem:[#allocation3] sm:$0xff]
        %v521 = vld [vmem:[#allocation3 + $0x8] sm:$0xff]
        %v522 = vld [vmem:[#allocation3 + $0x10] sm:$0xff]
        %v523 = vld [vmem:[#allocation3 + $0x18] sm:$0xff]
        %v524 = vld [vmem:[#allocation3 + $0x20] sm:$0xff]
        %v525 = vld [vmem:[#allocation3 + $0x28] sm:$0xff]
        %v526 = vsub.f32 %v496, %v514
        %v527 = vsub.f32 %v497, %v515
        %v528 = vsub.f32 %v498, %v516
        %v529 = vsub.f32 %v499, %v517
        %v530 = vsub.f32 %v500, %v518
        %v531 = vsub.f32 %v501, %v519
        %v532 = vmul.f32 %v526, 1.442695
        %v533 = vpow.pop %v532
        %v534 = vmul.f32 %v527, 1.442695
        %v535 = vpow.pop %v534
        %v536 = vmul.f32 %v528, 1.442695
        %v537 = vpow.pop %v536
        %v538 = vmul.f32 %v529, 1.442695
        %v539 = vpow.pop %v538
        %v540 = vmul.f32 %v530, 1.442695
        %v541 = vpow.pop %v540
        %v542 = vmul.f32 %v531, 1.442695
        %v543 = vpow.pop %v542
        %v544 = vmul.f32 %v520, %v533
        %v545 = vmul.f32 %v521, %v535
        %v546 = vmul.f32 %v522, %v537
        %v547 = vmul.f32 %v523, %v539
        %v548 = vmul.f32 %v524, %v541
        %v549 = vmul.f32 %v525, %v543
        %551 = vset.pattern.permute.xlu0 0
        %552 = vperm.xlu0 %551, %v514
        %v553 = vpop.permute.xlu0 %552
        %556 = vset.pattern.permute.xlu0 0
        %557 = vperm.xlu0 %556, %v515
        %v558 = vpop.permute.xlu0 %557
        %561 = vset.pattern.permute.xlu0 0
        %562 = vperm.xlu0 %561, %v516
        %v563 = vpop.permute.xlu0 %562
        %566 = vset.pattern.permute.xlu0 0
        %567 = vperm.xlu0 %566, %v517
        %v568 = vpop.permute.xlu0 %567
        %571 = vset.pattern.permute.xlu0 0
        %572 = vperm.xlu0 %571, %v518
        %v573 = vpop.permute.xlu0 %572
        %576 = vset.pattern.permute.xlu0 0
        %577 = vperm.xlu0 %576, %v519
        %v578 = vpop.permute.xlu0 %577
        %v580 = vsub.f32 %v490, %v553
        %v581 = vsub.f32 %v491, %v558
        %v582 = vsub.f32 %v492, %v563
        %v583 = vsub.f32 %v493, %v568
        %v584 = vsub.f32 %v494, %v573
        %v585 = vsub.f32 %v495, %v578
        %v586 = vmul.f32 %v580, 1.442695
        %v587 = vpow.pop %v586
        %v588 = vmul.f32 %v581, 1.442695
        %v589 = vpow.pop %v588
        %v590 = vmul.f32 %v582, 1.442695
        %v591 = vpow.pop %v590
        %v592 = vmul.f32 %v583, 1.442695
        %v593 = vpow.pop %v592
        %v594 = vmul.f32 %v584, 1.442695
        %v595 = vpow.pop %v594
        %v596 = vmul.f32 %v585, 1.442695
        %v597 = vpow.pop %v596
        %598 = vadd.xlane.f32.xlu0 %v587
        %v599 = vpop.xlane.xlu0 %598
        %600 = vadd.xlane.f32.xlu0 %v589
        %v601 = vpop.xlane.xlu0 %600
        %602 = vadd.xlane.f32.xlu0 %v591
        %v603 = vpop.xlane.xlu0 %602
        %604 = vadd.xlane.f32.xlu0 %v593
        %v605 = vpop.xlane.xlu0 %604
        %606 = vadd.xlane.f32.xlu0 %v595
        %v607 = vpop.xlane.xlu0 %606
        %608 = vadd.xlane.f32.xlu0 %v597
        %v609 = vpop.xlane.xlu0 %608
        %v610 = vadd.f32 %v544, %v599
        %v611 = vadd.f32 %v545, %v601
        %v612 = vadd.f32 %v546, %v603
        %v613 = vadd.f32 %v547, %v605
        %v614 = vadd.f32 %v548, %v607
        %v615 = vadd.f32 %v549, %v609
        %vm616 = vcmask 7168
        %617 = vst.msk [vmem:[#allocation3] sm:$0xff] %vm616, %v610
        %618 = vst.msk [vmem:[#allocation3 + $0x8] sm:$0xff] %vm616, %v611
        %619 = vst.msk [vmem:[#allocation3 + $0x10] sm:$0xff] %vm616, %v612
        %620 = vst.msk [vmem:[#allocation3 + $0x18] sm:$0xff] %vm616, %v613
        %621 = vst.msk [vmem:[#allocation3 + $0x20] sm:$0xff] %vm616, %v614
        %622 = vst.msk [vmem:[#allocation3 + $0x28] sm:$0xff] %vm616, %v615
        %623 = vst.msk [vmem:[#allocation2] sm:$0xff] %vm616, %v514
        %624 = vst.msk [vmem:[#allocation2 + $0x8] sm:$0xff] %vm616, %v515
        %625 = vst.msk [vmem:[#allocation2 + $0x10] sm:$0xff] %vm616, %v516
        %626 = vst.msk [vmem:[#allocation2 + $0x18] sm:$0xff] %vm616, %v517
        %627 = vst.msk [vmem:[#allocation2 + $0x20] sm:$0xff] %vm616, %v518
        %628 = vst.msk [vmem:[#allocation2 + $0x28] sm:$0xff] %vm616, %v519
        %v629 = vld [vmem:[#allocation2] sm:$0xff]
        %v630 = vld [vmem:[#allocation2 + $0x8] sm:$0xff]
        %v631 = vld [vmem:[#allocation2 + $0x10] sm:$0xff]
        %v632 = vld [vmem:[#allocation2 + $0x18] sm:$0xff]
        %v633 = vld [vmem:[#allocation2 + $0x20] sm:$0xff]
        %v634 = vld [vmem:[#allocation2 + $0x28] sm:$0xff]
        %v635 = vld [vmem:[#allocation3] sm:$0xff]
        %v636 = vld [vmem:[#allocation3 + $0x8] sm:$0xff]
        %v637 = vld [vmem:[#allocation3 + $0x10] sm:$0xff]
        %v638 = vld [vmem:[#allocation3 + $0x18] sm:$0xff]
        %v639 = vld [vmem:[#allocation3 + $0x20] sm:$0xff]
        %v640 = vld [vmem:[#allocation3 + $0x28] sm:$0xff]
        %v641 = vlog2.pop %v635
        %v642 = vmul.f32 %v641, 0.6931472
        %v643 = vlog2.pop %v636
        %v644 = vmul.f32 %v643, 0.6931472
        %v645 = vlog2.pop %v637
        %v646 = vmul.f32 %v645, 0.6931472
        %v647 = vlog2.pop %v638
        %v648 = vmul.f32 %v647, 0.6931472
        %v649 = vlog2.pop %v639
        %v650 = vmul.f32 %v649, 0.6931472
        %v651 = vlog2.pop %v640
        %v652 = vmul.f32 %v651, 0.6931472
        %v653 = vadd.f32 %v629, %v642
        %v654 = vadd.f32 %v630, %v644
        %v655 = vadd.f32 %v631, %v646
        %v656 = vadd.f32 %v632, %v648
        %v657 = vadd.f32 %v633, %v650
        %v658 = vadd.f32 %v634, %v652
        %659 = vst.msk [vmem:[%s179] sm:$0xff] %vm616, %v653
        %660 = vst.msk [vmem:[%s179 + $0x8] sm:$0xff] %vm616, %v654
        %661 = vst.msk [vmem:[%s179 + $0x10] sm:$0xff] %vm616, %v655
        %662 = vst.msk [vmem:[%s179 + $0x18] sm:$0xff] %vm616, %v656
        %663 = vst.msk [vmem:[%s179 + $0x20] sm:$0xff] %vm616, %v657
        %664 = vst.msk [vmem:[%s179 + $0x28] sm:$0xff] %vm616, %v658
      $region40: #{matching_loss.2} parent=27 // pred_fallthru
        _
      %s665 = smul.u32 6, %s17
      %p666 = scmp.lt.s32.totalorder %s665, 11
      %s667 = scalar_select %p666, %s665, 11
      %s668 = smul.addr %s667, 8
      %s669 = scalar_lea.vmem %s2, %s668
      // Predicated region
      $region41: #{matching_loss.2} parent=27 // pred_check
        %p670 = pneg %p95
      $region42: #{matching_loss.2} parent=27 // pred_check_branch
        %672 = sbr.rel (%p670) target = $region44
      $region43: #{matching_loss.2} parent=27 // pred_region
        %s673 = smul.u32 6, %s17
      $region44: #{matching_loss.2} parent=27 // pred_fallthru
        _
    $region28: #{matching_loss.2} parent=5 // pred_fallthru
      _
    %p674 = scmp.le.s32.totalorder 2, %s8
    // Predicated region
    $region45: #{matching_loss.2} parent=5 // pred_check
      %p675 = pneg %p674
    $region46: #{matching_loss.2} parent=5 // pred_check_branch
      %677 = sbr.rel (%p675) target = $region48
    $region47: #{matching_loss.2} parent=5 // pred_region
      %s678 = ssub.s32 %s8, 2
      // Predicated region
      $region49: #{matching_loss.2} parent=47 // pred_check
        %p679 = pneg %p101
      $region50: #{matching_loss.2} parent=47 // pred_check_branch
        %681 = sbr.rel (%p679) target = $region52
      $region51: #{matching_loss.2} parent=47 // pred_region
        %s682 = smul.u32 6, %s19
        %p683 = scmp.lt.s32.totalorder %s682, 11
        %s684 = scalar_select %p683, %s682, 11
        %s685 = smul.addr %s684, 8
        %s686 = scalar_lea.vmem %s2, %s685
      $region52: #{matching_loss.2} parent=47 // pred_fallthru
        _
    $region48: #{matching_loss.2} parent=5 // pred_fallthru
      _
  $region6: #{matching_loss.2} parent=0 // loop_footer
    %s12 = sadd.s32 1, %s8
  $region7: #{matching_loss.2} parent=0 // loop_footer_branch
    %7 = sbr.rel target = $region3
  $region8: #{matching_loss.2} parent=0 // loop_exit
    _

</llo_original>
